<compile_context>
chip_gen: v5e
topology: v5e:2x2
jax: 0.10.0
libtpu: 0.0.40
codegen_flags: <defaults>
</compile_context>

<pallas_src>
import functools

import jax
import jax.numpy as jnp
from jax.experimental import pallas as pl
from jax.experimental.pallas import tpu as pltpu

LN_EPS = 1e-5
L2_EPS = 1e-12


def _round_up(x, m):
    return (x + m - 1) // m * m


def general_layer_kernel(x_ref, w_ref, b_ref, gamma_ref, beta_ref, o_ref, *,
                         has_l2norm: bool):
    # x_ref: (tm, dim_in); w_ref: (dim_in, dim_out); b/gamma/beta: (1, dim_out)
    # Linear on the MXU: keep the input dtype (bf16 stays bf16), f32 accumulate.
    y = jnp.dot(x_ref[...], w_ref[...], preferred_element_type=jnp.float32)
    y = y + b_ref[...].astype(jnp.float32)

    # LayerNorm over the feature axis (biased variance, like nn.LayerNorm).
    mean = jnp.mean(y, axis=-1, keepdims=True)
    centered = y - mean
    var = jnp.mean(centered * centered, axis=-1, keepdims=True)
    y = centered * jax.lax.rsqrt(var + LN_EPS)
    y = y * gamma_ref[...].astype(jnp.float32) + beta_ref[...].astype(jnp.float32)
    # ReLU
    y = jnp.maximum(y, 0.0)

    if has_l2norm:
        # F.normalize(p=2, dim=1)
        norm = jnp.sqrt(jnp.sum(y * y, axis=-1, keepdims=True))
        y = y / jnp.maximum(norm, L2_EPS)

    o_ref[...] = y.astype(o_ref.dtype)


def _generation_config():
    """(vmem_budget_bytes, tm_max, want_multi_step) based on TPU generation."""
    try:
        kind = jax.devices()[0].device_kind.lower()
    except Exception:  # pragma: no cover - non-TPU / introspection failure
        kind = ""
    if "v7" in kind:
        # 64 MiB VMEM per TC (32 MiB default scoped limit); keep the per-TC
        # footprint small and make sure both TensorCores get row blocks.
        return 26 * 1024 * 1024, 512, True
    if "v6" in kind or "v5p" in kind or "v4" in kind:
        # 128 MiB physical VMEM; 512-1024 row tiles reach ~85% of HBM roofline.
        return 48 * 1024 * 1024, 1024, False
    # v5e / unknown: default scoped VMEM limit is 16 MiB -> stay safely under.
    return 13 * 1024 * 1024, 512, False


def general_layer(x, w, b, gamma, beta, *, has_l2norm=False, tm=None,
                  vmem_budget_bytes=None, mxu_dtype=None):
    """x: (N, dim_in); w: (dim_in, dim_out) (= PyTorch weight.T); b/gamma/beta: (dim_out,)."""
    N, dim_in = x.shape
    dim_out = w.shape[1]
    out_dtype = x.dtype

    # Optionally feed the MXU narrower operands (e.g. bf16 on v6e/v7x); LN/ReLU
    # math stays f32 via preferred_element_type + f32 epilogue.
    if mxu_dtype is not None:
        x = x.astype(mxu_dtype)
        w = w.astype(mxu_dtype)

    budget, tm_max, want_multi_step = _generation_config()
    if vmem_budget_bytes is not None:
        budget = vmem_budget_bytes
    if tm is not None:
        tm_max = tm

    itemsize = jnp.dtype(x.dtype).itemsize
    k128 = _round_up(dim_in, 128)       # lane-padded widths in VMEM
    d128 = _round_up(dim_out, 128)
    k8 = _round_up(dim_in, 8)

    def vmem_estimate(t):
        x_tiles = 2 * t * k128 * itemsize                 # double-buffered x tile
        o_tiles = 2 * t * d128 * itemsize                 # double-buffered out tile
        consts = 2 * (k8 * d128 * itemsize + 3 * 8 * d128 * 4)  # W + b/gamma/beta
        live = 3 * t * d128 * 4                           # f32 intermediates
        return x_tiles + o_tiles + consts + live

    # Row tile: as large as the generation-aware budget allows (multiple of 8).
    tm_eff = max(8, min(_round_up(tm_max, 8), _round_up(N, 8)))
    while tm_eff > 8 and vmem_estimate(tm_eff) > budget:
        tm_eff = max(8, _round_up(tm_eff // 2, 8))
    # TODO(synk): if dim_in*dim_out alone ever exceeds the budget (very wide
    # layers), add a K-tiled reduction grid axis with an f32 VMEM accumulator
    # instead of shrinking tm below ~128.

    if want_multi_step and N > 8:
        # v7x megacore: ensure >= 2 row-grid steps so both TensorCores work.
        tm_eff = min(tm_eff, max(8, _round_up(pl.cdiv(N, 2), 8)))

    grid = (pl.cdiv(N, tm_eff),)

    b2 = b.reshape(1, dim_out)
    g2 = gamma.reshape(1, dim_out)
    bt2 = beta.reshape(1, dim_out)

    kernel = functools.partial(general_layer_kernel, has_l2norm=has_l2norm)

    cost = pl.CostEstimate(
        flops=2 * N * dim_in * dim_out + 10 * N * dim_out,
        transcendentals=N * (2 if has_l2norm else 1),
        bytes_accessed=(N * dim_in + N * dim_out) * itemsize
        + (dim_in * dim_out) * itemsize + 3 * dim_out * 4,
    )

    out = pl.pallas_call(
        kernel,
        out_shape=jax.ShapeDtypeStruct((N, dim_out), out_dtype),
        grid_spec=pltpu.PrefetchScalarGridSpec(
            num_scalar_prefetch=0,
            grid=grid,
            in_specs=[
                pl.BlockSpec((tm_eff, dim_in), lambda i: (i, 0)),   # x row tile
                pl.BlockSpec((dim_in, dim_out), lambda i: (0, 0)),  # W (resident)
                pl.BlockSpec((1, dim_out), lambda i: (0, 0)),       # bias
                pl.BlockSpec((1, dim_out), lambda i: (0, 0)),       # LN gamma
                pl.BlockSpec((1, dim_out), lambda i: (0, 0)),       # LN beta
            ],
            out_specs=pl.BlockSpec((tm_eff, dim_out), lambda i: (i, 0)),
        ),
        compiler_params=pltpu.CompilerParams(
            # Row axis is independent -> shards across TensorCores on v7x.
            dimension_semantics=("parallel",),
            vmem_limit_bytes=int(budget * 1.25)),
        cost_estimate=cost,
    )(x, w, b2, g2, bt2)

    return out


def general_layer_ref(x, w, b, gamma, beta, *, has_l2norm=False):
    y = x @ w + b
    mean = jnp.mean(y, axis=-1, keepdims=True)
    var = jnp.mean((y - mean) ** 2, axis=-1, keepdims=True)
    y = (y - mean) / jnp.sqrt(var + LN_EPS)
    y = y * gamma + beta
    y = jnp.maximum(y, 0.0)
    if has_l2norm:
        y = y / jnp.maximum(
            jnp.sqrt(jnp.sum(y * y, axis=-1, keepdims=True)), L2_EPS)
    return y


if __name__ == "__main__":
    # Small GNN-ish shapes; N=600 deliberately exercises the ragged last row
    # block (600 is not a multiple of the row tile) and dim_out=96 exercises a
    # non-128-multiple lane width.
    N, dim_in, dim_out = 600, 48, 96

    key = jax.random.PRNGKey(0)
    kx, kw, kb, kg, kbt = jax.random.split(key, 5)

    x = jax.random.normal(kx, (N, dim_in), dtype=jnp.float32)
    # nn.Linear default init ~ U(-1/sqrt(fan_in), 1/sqrt(fan_in)); deterministic here.
    bound = 1.0 / (dim_in ** 0.5)
    w = jax.random.uniform(kw, (dim_in, dim_out), jnp.float32, -bound, bound)
    b = jax.random.uniform(kb, (dim_out,), jnp.float32, -bound, bound)
    # LayerNorm init: weight=1, bias=0 (perturbed slightly so the test is non-trivial).
    gamma = jnp.ones((dim_out,), jnp.float32) + 0.01 * jax.random.normal(kg, (dim_out,))
    beta = jnp.zeros((dim_out,), jnp.float32) + 0.01 * jax.random.normal(kbt, (dim_out,))

    for l2 in (False, True):
        for tm_arg in (None, 256):   # generation-aware default and forced multi-step/ragged tiling
            out = general_layer(x, w, b, gamma, beta, has_l2norm=l2, tm=tm_arg)
            out = jax.block_until_ready(out)
            ref = general_layer_ref(x, w, b, gamma, beta, has_l2norm=l2)
            assert out.shape == (N, dim_out)
            assert jnp.allclose(out, ref, atol=1e-4, rtol=1e-4), \
                f"mismatch (has_l2norm={l2}, tm={tm_arg})"

    print("KERNEL_OK")
</pallas_src>

<mosaic_0001>
module attributes {stable_mosaic.version = 11 : i64} {
  func.func @general_layer_kernel(%arg0: i32, %arg1: memref<512x48xf32, #tpu.memory_space<vmem>>, %arg2: memref<48x96xf32, #tpu.memory_space<vmem>>, %arg3: memref<1x96xf32, #tpu.memory_space<vmem>>, %arg4: memref<1x96xf32, #tpu.memory_space<vmem>>, %arg5: memref<1x96xf32, #tpu.memory_space<vmem>>, %arg6: memref<512x96xf32, #tpu.memory_space<vmem>>) attributes {dimension_semantics = [#tpu.dimension_semantics<parallel>], iteration_bounds = array<i64: 2>, scalar_prefetch = 0 : i64, scratch_operands = 0 : i64, tpu.core_type = #tpu.core_type<tc>, window_params = [{transform_indices = @transform_0, window_bounds = array<i64: 512, 48>}, {pipeline_mode = #tpu.pipeline_mode<synchronous>, transform_indices = @transform_1, window_bounds = array<i64: 48, 96>}, {pipeline_mode = #tpu.pipeline_mode<synchronous>, transform_indices = @transform_2, window_bounds = array<i64: 1, 96>}, {pipeline_mode = #tpu.pipeline_mode<synchronous>, transform_indices = @transform_3, window_bounds = array<i64: 1, 96>}, {pipeline_mode = #tpu.pipeline_mode<synchronous>, transform_indices = @transform_4, window_bounds = array<i64: 1, 96>}, {transform_indices = @transform_5, window_bounds = array<i64: 512, 96>}]} {
    %c0 = arith.constant 0 : index
    %c0_0 = arith.constant 0 : index
    %0 = vector.load %arg1[%c0, %c0_0] : memref<512x48xf32, #tpu.memory_space<vmem>>, vector<512x48xf32>
    %c0_1 = arith.constant 0 : index
    %c0_2 = arith.constant 0 : index
    %1 = vector.load %arg2[%c0_1, %c0_2] : memref<48x96xf32, #tpu.memory_space<vmem>>, vector<48x96xf32>
    %cst = arith.constant dense<0.000000e+00> : vector<512x96xf32>
    %2 = tpu.matmul %0, %1, %cst {dimension_numbers = #tpu.dot_dimension_numbers<[1], [0], [0], [1], [0, 0, 1, 1], [], []>} : vector<512x48xf32>, vector<48x96xf32>, vector<512x96xf32> -> vector<512x96xf32>
    %c0_3 = arith.constant 0 : index
    %c0_4 = arith.constant 0 : index
    %3 = vector.load %arg3[%c0_3, %c0_4] : memref<1x96xf32, #tpu.memory_space<vmem>>, vector<1x96xf32>
    %4 = vector.broadcast %3 : vector<1x96xf32> to vector<512x96xf32>
    %5 = arith.addf %2, %4 : vector<512x96xf32>
    %cst_5 = arith.constant dense<0.000000e+00> : vector<512xf32>
    %6 = vector.multi_reduction <add>, %5, %cst_5 [1] : vector<512x96xf32> to vector<512xf32>
    %7 = vector.shape_cast %6 : vector<512xf32> to vector<512x1xf32>
    %cst_6 = arith.constant 9.600000e+01 : f32
    %8 = vector.broadcast %cst_6 : f32 to vector<512x1xf32>
    %9 = arith.divf %7, %8 : vector<512x1xf32>
    %10 = vector.broadcast %9 : vector<512x1xf32> to vector<512x96xf32>
    %11 = arith.subf %5, %10 : vector<512x96xf32>
    %12 = arith.mulf %11, %11 : vector<512x96xf32>
    %cst_7 = arith.constant dense<0.000000e+00> : vector<512xf32>
    %13 = vector.multi_reduction <add>, %12, %cst_7 [1] : vector<512x96xf32> to vector<512xf32>
    %14 = vector.shape_cast %13 : vector<512xf32> to vector<512x1xf32>
    %cst_8 = arith.constant 9.600000e+01 : f32
    %15 = vector.broadcast %cst_8 : f32 to vector<512x1xf32>
    %16 = arith.divf %14, %15 : vector<512x1xf32>
    %cst_9 = arith.constant 9.99999974E-6 : f32
    %17 = vector.broadcast %cst_9 : f32 to vector<512x1xf32>
    %18 = arith.addf %16, %17 : vector<512x1xf32>
    %19 = math.rsqrt %18 : vector<512x1xf32>
    %20 = vector.broadcast %19 : vector<512x1xf32> to vector<512x96xf32>
    %21 = arith.mulf %11, %20 : vector<512x96xf32>
    %c0_10 = arith.constant 0 : index
    %c0_11 = arith.constant 0 : index
    %22 = vector.load %arg4[%c0_10, %c0_11] : memref<1x96xf32, #tpu.memory_space<vmem>>, vector<1x96xf32>
    %23 = vector.broadcast %22 : vector<1x96xf32> to vector<512x96xf32>
    %24 = arith.mulf %21, %23 : vector<512x96xf32>
    %c0_12 = arith.constant 0 : index
    %c0_13 = arith.constant 0 : index
    %25 = vector.load %arg5[%c0_12, %c0_13] : memref<1x96xf32, #tpu.memory_space<vmem>>, vector<1x96xf32>
    %26 = vector.broadcast %25 : vector<1x96xf32> to vector<512x96xf32>
    %27 = arith.addf %24, %26 : vector<512x96xf32>
    %cst_14 = arith.constant 0.000000e+00 : f32
    %28 = vector.broadcast %cst_14 : f32 to vector<512x96xf32>
    %29 = arith.maximumf %27, %28 : vector<512x96xf32>
    %c0_15 = arith.constant 0 : index
    %c0_16 = arith.constant 0 : index
    %30 = vector.load %arg6[%c0_15, %c0_16] : memref<512x96xf32, #tpu.memory_space<vmem>>, vector<512x96xf32>
    tpu.vector_store %arg6[%c0_15, %c0_16], %29 {strides = array<i32>} : memref<512x96xf32, #tpu.memory_space<vmem>>, vector<512x96xf32>,
    return
  }
  func.func @transform_0(%arg0: i32) -> (i32, i32) {
    %c0_i32 = arith.constant 0 : i32
    %c0_i32_0 = arith.constant 0 : i32
    return %arg0, %c0_i32 : i32, i32
  }
  func.func @transform_1(%arg0: i32) -> (i32, i32) {
    %c0_i32 = arith.constant 0 : i32
    %c0_i32_0 = arith.constant 0 : i32
    %c0_i32_1 = arith.constant 0 : i32
    return %c0_i32, %c0_i32_0 : i32, i32
  }
  func.func @transform_2(%arg0: i32) -> (i32, i32) {
    %c0_i32 = arith.constant 0 : i32
    %c0_i32_0 = arith.constant 0 : i32
    %c0_i32_1 = arith.constant 0 : i32
    return %c0_i32, %c0_i32_0 : i32, i32
  }
  func.func @transform_3(%arg0: i32) -> (i32, i32) {
    %c0_i32 = arith.constant 0 : i32
    %c0_i32_0 = arith.constant 0 : i32
    %c0_i32_1 = arith.constant 0 : i32
    return %c0_i32, %c0_i32_0 : i32, i32
  }
  func.func @transform_4(%arg0: i32) -> (i32, i32) {
    %c0_i32 = arith.constant 0 : i32
    %c0_i32_0 = arith.constant 0 : i32
    %c0_i32_1 = arith.constant 0 : i32
    return %c0_i32, %c0_i32_0 : i32, i32
  }
  func.func @transform_5(%arg0: i32) -> (i32, i32) {
    %c0_i32 = arith.constant 0 : i32
    %c0_i32_0 = arith.constant 0 : i32
    return %arg0, %c0_i32 : i32, i32
  }
}

</mosaic_0001>

<llo_original>
// kernel: tpu_custom_call.1
$region0: #{tpu_custom_call.1}
  #allocation0 [shape = 'u32[]', space=smem, size = 0x4, offset = 0x4, fixed_abs, tag = 'smem constant byte address 0x4 - core index']
  #allocation1 [shape = 'u32[72,128]{1,0:T(1,128)}', space=vmem, size = 0x9000, scoped, tag = 'internal scratch']
  %s0 = inlined_call_operand.vmem [shape: f32[600,48], index: 0, kind: input, shape index: {}]
  %s1 = inlined_call_operand.vmem [shape: f32[48,96], index: 1, kind: input, shape index: {}]
  %s2 = inlined_call_operand.vmem [shape: f32[1,96], index: 2, kind: input, shape index: {}]
  %s3 = inlined_call_operand.vmem [shape: f32[1,96], index: 3, kind: input, shape index: {}]
  %s4 = inlined_call_operand.vmem [shape: f32[1,96], index: 4, kind: input, shape index: {}]
  %s5 = inlined_call_operand.vmem [shape: f32[600,96], index: 5, kind: output, shape index: {}]
  %s6 = sld [smem:[#allocation0]]
  $region101: #{tpu_custom_call.1} parent=0
    _
  %s8 = ssub.s32 1, %s6
  %s9 = scalar_select 0, %s8, %s6
  $region1: #{tpu_custom_call.1} parent=0
    #allocation2 [shape = 'u8[524288]{0}', space=vmem, size = 0x80000, scoped, tag = 'output window, operand 0']
    loop: start=0, step=1, limit=4
    $region2: #{tpu_custom_call.1} parent=1 // loop_pre_header
      _
    $region3: #{tpu_custom_call.1} parent=1 // loop_header
      %s11 = sphi 0, %s15
      %p12 = scmp.ge.s32.totalorder %s11, 4
      %s21 = sphi 0, %s23
      %s24 = sphi 0, %s21
      %s25 = sphi 0, %s24
      %s41 = sphi 0, %s25
      %s45 = sphi 0, %s45
      %s47 = sphi 0, %s45
      %s48 = sphi 0, %s47
      %s62 = sphi 0, %s48
      %s66 = sphi 0, %s66
      %s68 = sphi 0, %s66
      %s69 = sphi 0, %s68
      %s83 = sphi 0, %s69
      %s87 = sphi 0, %s87
      %s89 = sphi 0, %s87
      %s90 = sphi 0, %s89
      %s104 = sphi 0, %s90
      %s108 = sphi 0, %s108
      %s110 = sphi 0, %s108
      %s111 = sphi 0, %s110
      %s125 = sphi 0, %s111
      %s131 = sphi 0, %s133
      %s134 = sphi 0, %s131
      %s135 = sphi 0, %s134
      %s151 = sphi 0, %s135
    $region4: #{tpu_custom_call.1} parent=1 // loop_header_branch
      %14 = sbr.rel (%p12) target = $region8
    $region5: #{tpu_custom_call.1} parent=1 // loop_body
      %s16 = ssub.s32 %s11, 1
      %s17 = ssub.s32 %s11, 2
      %s18 = sadd.s32 %s11, 1
      %s19 = ssub.s32 %s11, %s18
      %p20 = scmp.eq.s32.totalorder %s19, 0
      %s22 = sadd.s32 %s21, 1
      %s23 = scalar_select %p20, %s21, %s22
      %p26 = pneg %p20
      %p27 = scmp.eq.s32.totalorder %s11, 1
      %p28 = por %p26, %p27
      %p29 = scmp.ne.s32.totalorder %s21, %s24
      %p30 = scmp.eq.s32.totalorder %s11, 0
      %p31 = por %p29, %p30
      %p32 = scmp.ne.s32.totalorder %s21, %s24
      %p33 = scmp.eq.s32.totalorder %s16, 1
      %p34 = por %p32, %p33
      %p35 = scmp.ne.s32.totalorder %s24, %s25
      %p36 = scmp.eq.s32.totalorder %s16, 0
      %p37 = por %p35, %p36
      %p38 = scmp.ne.s32.totalorder %s24, %s25
      %p39 = scmp.eq.s32.totalorder %s17, 1
      %p40 = por %p38, %p39
      %p42 = scmp.ne.s32.totalorder %s25, %s41
      %p43 = scmp.eq.s32.totalorder %s17, 0
      %p44 = por %p42, %p43
      %s46 = sadd.s32 %s45, 1
      %p49 = scmp.eq.s32.totalorder %s11, 1
      %p50 = scmp.ne.s32.totalorder %s45, %s47
      %p51 = scmp.eq.s32.totalorder %s11, 0
      %p52 = por %p50, %p51
      %p53 = scmp.ne.s32.totalorder %s45, %s47
      %p54 = scmp.eq.s32.totalorder %s16, 1
      %p55 = por %p53, %p54
      %p56 = scmp.ne.s32.totalorder %s47, %s48
      %p57 = scmp.eq.s32.totalorder %s16, 0
      %p58 = por %p56, %p57
      %p59 = scmp.ne.s32.totalorder %s47, %s48
      %p60 = scmp.eq.s32.totalorder %s17, 1
      %p61 = por %p59, %p60
      %p63 = scmp.ne.s32.totalorder %s48, %s62
      %p64 = scmp.eq.s32.totalorder %s17, 0
      %p65 = por %p63, %p64
      %s67 = sadd.s32 %s66, 1
      %p70 = scmp.eq.s32.totalorder %s11, 1
      %p71 = scmp.ne.s32.totalorder %s66, %s68
      %p72 = scmp.eq.s32.totalorder %s11, 0
      %p73 = por %p71, %p72
      %p74 = scmp.ne.s32.totalorder %s66, %s68
      %p75 = scmp.eq.s32.totalorder %s16, 1
      %p76 = por %p74, %p75
      %p77 = scmp.ne.s32.totalorder %s68, %s69
      %p78 = scmp.eq.s32.totalorder %s16, 0
      %p79 = por %p77, %p78
      %p80 = scmp.ne.s32.totalorder %s68, %s69
      %p81 = scmp.eq.s32.totalorder %s17, 1
      %p82 = por %p80, %p81
      %p84 = scmp.ne.s32.totalorder %s69, %s83
      %p85 = scmp.eq.s32.totalorder %s17, 0
      %p86 = por %p84, %p85
      %s88 = sadd.s32 %s87, 1
      %p91 = scmp.eq.s32.totalorder %s11, 1
      %p92 = scmp.ne.s32.totalorder %s87, %s89
      %p93 = scmp.eq.s32.totalorder %s11, 0
      %p94 = por %p92, %p93
      %p95 = scmp.ne.s32.totalorder %s87, %s89
      %p96 = scmp.eq.s32.totalorder %s16, 1
      %p97 = por %p95, %p96
      %p98 = scmp.ne.s32.totalorder %s89, %s90
      %p99 = scmp.eq.s32.totalorder %s16, 0
      %p100 = por %p98, %p99
      %p101 = scmp.ne.s32.totalorder %s89, %s90
      %p102 = scmp.eq.s32.totalorder %s17, 1
      %p103 = por %p101, %p102
      %p105 = scmp.ne.s32.totalorder %s90, %s104
      %p106 = scmp.eq.s32.totalorder %s17, 0
      %p107 = por %p105, %p106
      %s109 = sadd.s32 %s108, 1
      %p112 = scmp.eq.s32.totalorder %s11, 1
      %p113 = scmp.ne.s32.totalorder %s108, %s110
      %p114 = scmp.eq.s32.totalorder %s11, 0
      %p115 = por %p113, %p114
      %p116 = scmp.ne.s32.totalorder %s108, %s110
      %p117 = scmp.eq.s32.totalorder %s16, 1
      %p118 = por %p116, %p117
      %p119 = scmp.ne.s32.totalorder %s110, %s111
      %p120 = scmp.eq.s32.totalorder %s16, 0
      %p121 = por %p119, %p120
      %p122 = scmp.ne.s32.totalorder %s110, %s111
      %p123 = scmp.eq.s32.totalorder %s17, 1
      %p124 = por %p122, %p123
      %p126 = scmp.ne.s32.totalorder %s111, %s125
      %p127 = scmp.eq.s32.totalorder %s17, 0
      %p128 = por %p126, %p127
      %s129 = ssub.s32 %s11, %s18
      %p130 = scmp.eq.s32.totalorder %s129, 0
      %s132 = sadd.s32 %s131, 1
      %s133 = scalar_select %p130, %s131, %s132
      %p136 = pneg %p130
      %p137 = scmp.eq.s32.totalorder %s11, 1
      %p138 = por %p136, %p137
      %p139 = scmp.ne.s32.totalorder %s131, %s134
      %p140 = scmp.eq.s32.totalorder %s11, 0
      %p141 = por %p139, %p140
      %p142 = scmp.ne.s32.totalorder %s131, %s134
      %p143 = scmp.eq.s32.totalorder %s16, 1
      %p144 = por %p142, %p143
      %p145 = scmp.ne.s32.totalorder %s134, %s135
      %p146 = scmp.eq.s32.totalorder %s16, 0
      %p147 = por %p145, %p146
      %p148 = scmp.ne.s32.totalorder %s134, %s135
      %p149 = scmp.eq.s32.totalorder %s17, 1
      %p150 = por %p148, %p149
      %p152 = scmp.ne.s32.totalorder %s135, %s151
      %p153 = scmp.eq.s32.totalorder %s17, 0
      %p154 = por %p152, %p153
      %p155 = scmp.le.s32.totalorder 1, %s11
      %p156 = scmp.lt.s32.totalorder %s11, 3
      %p157 = pnand %p155, %p156
      %p158 = pneg %p157
      // Predicated region
      $region9: #{tpu_custom_call.1} parent=5 // pred_check
        _
      $region10: #{tpu_custom_call.1} parent=5 // pred_check_branch
        %160 = sbr.rel (%p157) target = $region12
      $region11: #{tpu_custom_call.1} parent=5 // pred_region
        %s161 = ssub.s32 %s11, 1
        // Predicated region
        $region13: #{tpu_custom_call.1} parent=11 // pred_check
          %p162 = pneg %p58
        $region14: #{tpu_custom_call.1} parent=11 // pred_check_branch
          %164 = sbr.rel (%p162) target = $region16
        $region15: #{tpu_custom_call.1} parent=11 // pred_region
          _
        $region16: #{tpu_custom_call.1} parent=11 // pred_fallthru
          _
        // Predicated region
        $region17: #{tpu_custom_call.1} parent=11 // pred_check
          %p165 = pneg %p79
        $region18: #{tpu_custom_call.1} parent=11 // pred_check_branch
          %167 = sbr.rel (%p165) target = $region20
        $region19: #{tpu_custom_call.1} parent=11 // pred_region
          _
        $region20: #{tpu_custom_call.1} parent=11 // pred_fallthru
          _
        // Predicated region
        $region21: #{tpu_custom_call.1} parent=11 // pred_check
          %p168 = pneg %p100
        $region22: #{tpu_custom_call.1} parent=11 // pred_check_branch
          %170 = sbr.rel (%p168) target = $region24
        $region23: #{tpu_custom_call.1} parent=11 // pred_region
          _
        $region24: #{tpu_custom_call.1} parent=11 // pred_fallthru
          _
        // Predicated region
        $region25: #{tpu_custom_call.1} parent=11 // pred_check
          %p171 = pneg %p121
        $region26: #{tpu_custom_call.1} parent=11 // pred_check_branch
          %173 = sbr.rel (%p171) target = $region28
        $region27: #{tpu_custom_call.1} parent=11 // pred_region
          _
        $region28: #{tpu_custom_call.1} parent=11 // pred_fallthru
          _
      $region12: #{tpu_custom_call.1} parent=5 // pred_fallthru
        _
      %p174 = scmp.lt.s32.totalorder %s11, 2
      // Predicated region
      $region29: #{tpu_custom_call.1} parent=5 // pred_check
        %p175 = pneg %p174
      $region30: #{tpu_custom_call.1} parent=5 // pred_check_branch
        %177 = sbr.rel (%p175) target = $region32
      $region31: #{tpu_custom_call.1} parent=5 // pred_region
        // Predicated region
        $region33: #{tpu_custom_call.1} parent=31 // pred_check
          %p178 = pneg %p31
        $region34: #{tpu_custom_call.1} parent=31 // pred_check_branch
          %180 = sbr.rel (%p178) target = $region36
        $region35: #{tpu_custom_call.1} parent=31 // pred_region
          %s181 = smul.u32 64, %s11
          %s182 = ssub.s32 75, %s181
          %p183 = scmp.lt.s32.totalorder %s182, 64
          %s184 = scalar_select %p183, %s182, 64
          %s185 = smul.u32 8, %s184
          %p186 = scmp.lt.s32.totalorder %s181, 74
          %s187 = scalar_select %p186, %s181, 74
          %s188 = smul.addr %s187, 8
          %s189 = scalar_lea.vmem %s0, %s188
          %s190 = smul.u32 64, %s11
          %s191 = ssub.s32 75, %s190
          %p192 = scmp.lt.s32.totalorder %s191, 64
          %s193 = scalar_select %p192, %s191, 64
          %s194 = smul.u32 8, %s193
        $region36: #{tpu_custom_call.1} parent=31 // pred_fallthru
          _
      $region32: #{tpu_custom_call.1} parent=5 // pred_fallthru
        _
      %p195 = scmp.le.s32.totalorder 1, %s11
      %p196 = scmp.lt.s32.totalorder %s11, 3
      %p197 = pnand %p195, %p196
      %p198 = pneg %p197
      // Predicated region
      $region37: #{tpu_custom_call.1} parent=5 // pred_check
        _
      $region38: #{tpu_custom_call.1} parent=5 // pred_check_branch
        %200 = sbr.rel (%p197) target = $region40
      $region39: #{tpu_custom_call.1} parent=5 // pred_region
        %s201 = ssub.s32 %s11, 1
        %s202 = smul.u32 64, %s16
        %s203 = ssub.s32 75, %s202
        %p204 = scmp.lt.s32.totalorder %s203, 64
        %s205 = scalar_select %p204, %s203, 64
        %s206 = smul.u32 8, %s205
        %p207 = scmp.lt.s32.totalorder %s202, 74
        %s208 = scalar_select %p207, %s202, 74
        %s209 = smul.addr %s208, 8
        %s210 = scalar_lea.vmem %s0, %s209
        %p211 = pneg %p37
        %p212 = pneg %p34
        %p213 = pneg %p58
        %p214 = pneg %p55
        %p215 = pneg %p79
        %p216 = pneg %p76
        %p217 = pneg %p100
        %p218 = pneg %p97
        %p219 = pneg %p121
        %p220 = pneg %p118
        %p221 = pneg %p147
        %p222 = pneg %p144
        %s223 = sand.u32 %s134, 1
        %s224 = sand.u32 %s134, 1
        %s225 = smul.addr %s224, 512
        %s226 = scalar_lea.vmem [#allocation2], %s225
        %s227 = smul.u32 64, %s16
        %s228 = ssub.s32 75, %s227
        %p229 = scmp.lt.s32.totalorder %s228, 64
        %s230 = scalar_select %p229, %s228, 64
        %s231 = smul.u32 8, %s230
        %p232 = scmp.lt.s32.totalorder %s227, 74
        %s233 = scalar_select %p232, %s227, 74
        %s234 = smul.addr %s233, 8
        %s235 = scalar_lea.vmem %s0, %s234
        %s236 = smul.u32 64, %s16
        %s237 = ssub.s32 75, %s236
        %p238 = scmp.lt.s32.totalorder %s237, 64
        %s239 = scalar_select %p238, %s237, 64
        %s240 = smul.u32 8, %s239
        %s241 = smul.u32 64, %s16
        %s242 = ssub.s32 75, %s241
        %p243 = scmp.lt.s32.totalorder %s242, 64
        %s244 = scalar_select %p243, %s242, 64
        %s245 = smul.u32 8, %s244
        %v246 = vld [vmem:[%s235] sm:$0xff]
        %v247 = vld [vmem:[%s235 + $0x8] sm:$0xff]
        %v248 = vld [vmem:[%s235 + $0x10] sm:$0xff]
        %v249 = vld [vmem:[%s235 + $0x18] sm:$0xff]
        %v250 = vld [vmem:[%s235 + $0x20] sm:$0xff]
        %v251 = vld [vmem:[%s235 + $0x28] sm:$0xff]
        %v252 = vld [vmem:[%s235 + $0x30] sm:$0xff]
        %v253 = vld [vmem:[%s235 + $0x38] sm:$0xff]
        %v254 = vld [vmem:[%s235 + $0x40] sm:$0xff]
        %v255 = vld [vmem:[%s235 + $0x48] sm:$0xff]
        %v256 = vld [vmem:[%s235 + $0x50] sm:$0xff]
        %v257 = vld [vmem:[%s235 + $0x58] sm:$0xff]
        %v258 = vld [vmem:[%s235 + $0x60] sm:$0xff]
        %v259 = vld [vmem:[%s235 + $0x68] sm:$0xff]
        %v260 = vld [vmem:[%s235 + $0x70] sm:$0xff]
        %v261 = vld [vmem:[%s235 + $0x78] sm:$0xff]
        %v262 = vld [vmem:[%s235 + $0x80] sm:$0xff]
        %v263 = vld [vmem:[%s235 + $0x88] sm:$0xff]
        %v264 = vld [vmem:[%s235 + $0x90] sm:$0xff]
        %v265 = vld [vmem:[%s235 + $0x98] sm:$0xff]
        %v266 = vld [vmem:[%s235 + $0xa0] sm:$0xff]
        %v267 = vld [vmem:[%s235 + $0xa8] sm:$0xff]
        %v268 = vld [vmem:[%s235 + $0xb0] sm:$0xff]
        %v269 = vld [vmem:[%s235 + $0xb8] sm:$0xff]
        %v270 = vld [vmem:[%s235 + $0xc0] sm:$0xff]
        %v271 = vld [vmem:[%s235 + $0xc8] sm:$0xff]
        %v272 = vld [vmem:[%s235 + $0xd0] sm:$0xff]
        %v273 = vld [vmem:[%s235 + $0xd8] sm:$0xff]
        %v274 = vld [vmem:[%s235 + $0xe0] sm:$0xff]
        %v275 = vld [vmem:[%s235 + $0xe8] sm:$0xff]
        %v276 = vld [vmem:[%s235 + $0xf0] sm:$0xff]
        %v277 = vld [vmem:[%s235 + $0xf8] sm:$0xff]
        %v278 = vld [vmem:[%s235 + $0x100] sm:$0xff]
        %v279 = vld [vmem:[%s235 + $0x108] sm:$0xff]
        %v280 = vld [vmem:[%s235 + $0x110] sm:$0xff]
        %v281 = vld [vmem:[%s235 + $0x118] sm:$0xff]
        %v282 = vld [vmem:[%s235 + $0x120] sm:$0xff]
        %v283 = vld [vmem:[%s235 + $0x128] sm:$0xff]
        %v284 = vld [vmem:[%s235 + $0x130] sm:$0xff]
        %v285 = vld [vmem:[%s235 + $0x138] sm:$0xff]
        %v286 = vld [vmem:[%s235 + $0x140] sm:$0xff]
        %v287 = vld [vmem:[%s235 + $0x148] sm:$0xff]
        %v288 = vld [vmem:[%s235 + $0x150] sm:$0xff]
        %v289 = vld [vmem:[%s235 + $0x158] sm:$0xff]
        %v290 = vld [vmem:[%s235 + $0x160] sm:$0xff]
        %v291 = vld [vmem:[%s235 + $0x168] sm:$0xff]
        %v292 = vld [vmem:[%s235 + $0x170] sm:$0xff]
        %v293 = vld [vmem:[%s235 + $0x178] sm:$0xff]
        %v294 = vld [vmem:[%s235 + $0x180] sm:$0xff]
        %v295 = vld [vmem:[%s235 + $0x188] sm:$0xff]
        %v296 = vld [vmem:[%s235 + $0x190] sm:$0xff]
        %v297 = vld [vmem:[%s235 + $0x198] sm:$0xff]
        %v298 = vld [vmem:[%s235 + $0x1a0] sm:$0xff]
        %v299 = vld [vmem:[%s235 + $0x1a8] sm:$0xff]
        %v300 = vld [vmem:[%s235 + $0x1b0] sm:$0xff]
        %v301 = vld [vmem:[%s235 + $0x1b8] sm:$0xff]
        %v302 = vld [vmem:[%s235 + $0x1c0] sm:$0xff]
        %v303 = vld [vmem:[%s235 + $0x1c8] sm:$0xff]
        %v304 = vld [vmem:[%s235 + $0x1d0] sm:$0xff]
        %v305 = vld [vmem:[%s235 + $0x1d8] sm:$0xff]
        %v306 = vld [vmem:[%s235 + $0x1e0] sm:$0xff]
        %v307 = vld [vmem:[%s235 + $0x1e8] sm:$0xff]
        %v308 = vld [vmem:[%s235 + $0x1f0] sm:$0xff]
        %v309 = vld [vmem:[%s235 + $0x1f8] sm:$0xff]
        %v310 = vld [vmem:[%s1] sm:$0xff]
        %v311 = vld [vmem:[%s1 + $0x8] sm:$0xff]
        %v312 = vld [vmem:[%s1 + $0x10] sm:$0xff]
        %v313 = vld [vmem:[%s1 + $0x18] sm:$0xff]
        %v314 = vld [vmem:[%s1 + $0x20] sm:$0xff]
        %v315 = vld [vmem:[%s1 + $0x28] sm:$0xff]
        %v316 = vld [vmem:[%s2] sm:$0x1]
        %v318 = vperm.slane %v316, 0
        %vm320 = vcmask 392192
        %v322 = vsel %vm320, %v246, 0
        %v325 = vsel %vm320, %v247, 0
        %v328 = vsel %vm320, %v248, 0
        %v331 = vsel %vm320, %v249, 0
        %v334 = vsel %vm320, %v250, 0
        %v337 = vsel %vm320, %v251, 0
        %v340 = vsel %vm320, %v252, 0
        %v343 = vsel %vm320, %v253, 0
        %v346 = vsel %vm320, %v254, 0
        %v349 = vsel %vm320, %v255, 0
        %v352 = vsel %vm320, %v256, 0
        %v355 = vsel %vm320, %v257, 0
        %v358 = vsel %vm320, %v258, 0
        %v361 = vsel %vm320, %v259, 0
        %v364 = vsel %vm320, %v260, 0
        %v367 = vsel %vm320, %v261, 0
        %v370 = vsel %vm320, %v262, 0
        %v373 = vsel %vm320, %v263, 0
        %v376 = vsel %vm320, %v264, 0
        %v379 = vsel %vm320, %v265, 0
        %v382 = vsel %vm320, %v266, 0
        %v385 = vsel %vm320, %v267, 0
        %v388 = vsel %vm320, %v268, 0
        %v391 = vsel %vm320, %v269, 0
        %v394 = vsel %vm320, %v270, 0
        %v397 = vsel %vm320, %v271, 0
        %v400 = vsel %vm320, %v272, 0
        %v403 = vsel %vm320, %v273, 0
        %v406 = vsel %vm320, %v274, 0
        %v409 = vsel %vm320, %v275, 0
        %v412 = vsel %vm320, %v276, 0
        %v415 = vsel %vm320, %v277, 0
        %v418 = vsel %vm320, %v278, 0
        %v421 = vsel %vm320, %v279, 0
        %v424 = vsel %vm320, %v280, 0
        %v427 = vsel %vm320, %v281, 0
        %v430 = vsel %vm320, %v282, 0
        %v433 = vsel %vm320, %v283, 0
        %v436 = vsel %vm320, %v284, 0
        %v439 = vsel %vm320, %v285, 0
        %v442 = vsel %vm320, %v286, 0
        %v445 = vsel %vm320, %v287, 0
        %v448 = vsel %vm320, %v288, 0
        %v451 = vsel %vm320, %v289, 0
        %v454 = vsel %vm320, %v290, 0
        %v457 = vsel %vm320, %v291, 0
        %v460 = vsel %vm320, %v292, 0
        %v463 = vsel %vm320, %v293, 0
        %v466 = vsel %vm320, %v294, 0
        %v469 = vsel %vm320, %v295, 0
        %v472 = vsel %vm320, %v296, 0
        %v475 = vsel %vm320, %v297, 0
        %v478 = vsel %vm320, %v298, 0
        %v481 = vsel %vm320, %v299, 0
        %v484 = vsel %vm320, %v300, 0
        %v487 = vsel %vm320, %v301, 0
        %v490 = vsel %vm320, %v302, 0
        %v493 = vsel %vm320, %v303, 0
        %v496 = vsel %vm320, %v304, 0
        %v499 = vsel %vm320, %v305, 0
        %v502 = vsel %vm320, %v306, 0
        %v505 = vsel %vm320, %v307, 0
        %v508 = vsel %vm320, %v308, 0
        %v511 = vsel %vm320, %v309, 0
        %513 = vmatpush.msra.mxu0 0.0
        %514 = vmatpush.msra.mxu0 0.0
        %515 = vmatpush.msra.mxu0 0.0
        %516 = vmatpush.msra.mxu0 0.0
        %517 = vmatpush.msra.mxu0 0.0
        %518 = vmatpush.msra.mxu0 0.0
        %519 = vmatpush.msra.mxu0 0.0
        %520 = vmatpush.msra.mxu0 0.0
        %521 = vmatpush.msra.mxu0 0.0
        %522 = vmatpush.msra.mxu0 0.0
        %523 = vmatpush.msra.mxu0 %v315
        %524 = vmatpush.msra.mxu0 %v314
        %525 = vmatpush.msra.mxu0 %v313
        %526 = vmatpush.msra.mxu0 %v312
        %527 = vmatpush.msra.mxu0 %v311
        %528 = vmatpush.msra.mxu0 %v310
        %529 = vmatmul.f32.gmra.mxu0 %v322
        %v530 = vpop.f32.mrf.mxu0
        %v531 = vadd.f32 %v318, %v530
        %532 = vmatmul.f32.gmra.mxu0 %v325
        %v533 = vpop.f32.mrf.mxu0
        %v534 = vadd.f32 %v318, %v533
        %535 = vmatmul.f32.gmra.mxu0 %v328
        %v536 = vpop.f32.mrf.mxu0
        %v537 = vadd.f32 %v318, %v536
        %538 = vmatmul.f32.gmra.mxu0 %v331
        %v539 = vpop.f32.mrf.mxu0
        %v540 = vadd.f32 %v318, %v539
        %541 = vmatmul.f32.gmra.mxu0 %v334
        %v542 = vpop.f32.mrf.mxu0
        %v543 = vadd.f32 %v318, %v542
        %544 = vmatmul.f32.gmra.mxu0 %v337
        %v545 = vpop.f32.mrf.mxu0
        %v546 = vadd.f32 %v318, %v545
        %547 = vmatmul.f32.gmra.mxu0 %v340
        %v548 = vpop.f32.mrf.mxu0
        %v549 = vadd.f32 %v318, %v548
        %550 = vmatmul.f32.gmra.mxu0 %v343
        %v551 = vpop.f32.mrf.mxu0
        %v552 = vadd.f32 %v318, %v551
        %553 = vmatmul.f32.gmra.mxu0 %v346
        %v554 = vpop.f32.mrf.mxu0
        %v555 = vadd.f32 %v318, %v554
        %556 = vmatmul.f32.gmra.mxu0 %v349
        %v557 = vpop.f32.mrf.mxu0
        %v558 = vadd.f32 %v318, %v557
        %559 = vmatmul.f32.gmra.mxu0 %v352
        %v560 = vpop.f32.mrf.mxu0
        %v561 = vadd.f32 %v318, %v560
        %562 = vmatmul.f32.gmra.mxu0 %v355
        %v563 = vpop.f32.mrf.mxu0
        %v564 = vadd.f32 %v318, %v563
        %565 = vmatmul.f32.gmra.mxu0 %v358
        %v566 = vpop.f32.mrf.mxu0
        %v567 = vadd.f32 %v318, %v566
        %568 = vmatmul.f32.gmra.mxu0 %v361
        %v569 = vpop.f32.mrf.mxu0
        %v570 = vadd.f32 %v318, %v569
        %571 = vmatmul.f32.gmra.mxu0 %v364
        %v572 = vpop.f32.mrf.mxu0
        %v573 = vadd.f32 %v318, %v572
        %574 = vmatmul.f32.gmra.mxu0 %v367
        %v575 = vpop.f32.mrf.mxu0
        %v576 = vadd.f32 %v318, %v575
        %577 = vmatmul.f32.gmra.mxu0 %v370
        %v578 = vpop.f32.mrf.mxu0
        %v579 = vadd.f32 %v318, %v578
        %580 = vmatmul.f32.gmra.mxu0 %v373
        %v581 = vpop.f32.mrf.mxu0
        %v582 = vadd.f32 %v318, %v581
        %583 = vmatmul.f32.gmra.mxu0 %v376
        %v584 = vpop.f32.mrf.mxu0
        %v585 = vadd.f32 %v318, %v584
        %586 = vmatmul.f32.gmra.mxu0 %v379
        %v587 = vpop.f32.mrf.mxu0
        %v588 = vadd.f32 %v318, %v587
        %589 = vmatmul.f32.gmra.mxu0 %v382
        %v590 = vpop.f32.mrf.mxu0
        %v591 = vadd.f32 %v318, %v590
        %592 = vmatmul.f32.gmra.mxu0 %v385
        %v593 = vpop.f32.mrf.mxu0
        %v594 = vadd.f32 %v318, %v593
        %595 = vmatmul.f32.gmra.mxu0 %v388
        %v596 = vpop.f32.mrf.mxu0
        %v597 = vadd.f32 %v318, %v596
        %598 = vmatmul.f32.gmra.mxu0 %v391
        %v599 = vpop.f32.mrf.mxu0
        %v600 = vadd.f32 %v318, %v599
        %601 = vmatmul.f32.gmra.mxu0 %v394
        %v602 = vpop.f32.mrf.mxu0
        %v603 = vadd.f32 %v318, %v602
        %604 = vmatmul.f32.gmra.mxu0 %v397
        %v605 = vpop.f32.mrf.mxu0
        %v606 = vadd.f32 %v318, %v605
        %607 = vmatmul.f32.gmra.mxu0 %v400
        %v608 = vpop.f32.mrf.mxu0
        %v609 = vadd.f32 %v318, %v608
        %610 = vmatmul.f32.gmra.mxu0 %v403
        %v611 = vpop.f32.mrf.mxu0
        %v612 = vadd.f32 %v318, %v611
        %613 = vmatmul.f32.gmra.mxu0 %v406
        %v614 = vpop.f32.mrf.mxu0
        %v615 = vadd.f32 %v318, %v614
        %616 = vmatmul.f32.gmra.mxu0 %v409
        %v617 = vpop.f32.mrf.mxu0
        %v618 = vadd.f32 %v318, %v617
        %619 = vmatmul.f32.gmra.mxu0 %v412
        %v620 = vpop.f32.mrf.mxu0
        %v621 = vadd.f32 %v318, %v620
        %622 = vmatmul.f32.gmra.mxu0 %v415
        %v623 = vpop.f32.mrf.mxu0
        %v624 = vadd.f32 %v318, %v623
        %625 = vmatmul.f32.gmra.mxu0 %v418
        %v626 = vpop.f32.mrf.mxu0
        %v627 = vadd.f32 %v318, %v626
        %628 = vmatmul.f32.gmra.mxu0 %v421
        %v629 = vpop.f32.mrf.mxu0
        %v630 = vadd.f32 %v318, %v629
        %631 = vmatmul.f32.gmra.mxu0 %v424
        %v632 = vpop.f32.mrf.mxu0
        %v633 = vadd.f32 %v318, %v632
        %634 = vmatmul.f32.gmra.mxu0 %v427
        %v635 = vpop.f32.mrf.mxu0
        %v636 = vadd.f32 %v318, %v635
        %637 = vmatmul.f32.gmra.mxu0 %v430
        %v638 = vpop.f32.mrf.mxu0
        %v639 = vadd.f32 %v318, %v638
        %640 = vmatmul.f32.gmra.mxu0 %v433
        %v641 = vpop.f32.mrf.mxu0
        %v642 = vadd.f32 %v318, %v641
        %643 = vmatmul.f32.gmra.mxu0 %v436
        %v644 = vpop.f32.mrf.mxu0
        %v645 = vadd.f32 %v318, %v644
        %646 = vmatmul.f32.gmra.mxu0 %v439
        %v647 = vpop.f32.mrf.mxu0
        %v648 = vadd.f32 %v318, %v647
        %649 = vmatmul.f32.gmra.mxu0 %v442
        %v650 = vpop.f32.mrf.mxu0
        %v651 = vadd.f32 %v318, %v650
        %652 = vmatmul.f32.gmra.mxu0 %v445
        %v653 = vpop.f32.mrf.mxu0
        %v654 = vadd.f32 %v318, %v653
        %655 = vmatmul.f32.gmra.mxu0 %v448
        %v656 = vpop.f32.mrf.mxu0
        %v657 = vadd.f32 %v318, %v656
        %658 = vmatmul.f32.gmra.mxu0 %v451
        %v659 = vpop.f32.mrf.mxu0
        %v660 = vadd.f32 %v318, %v659
        %661 = vmatmul.f32.gmra.mxu0 %v454
        %v662 = vpop.f32.mrf.mxu0
        %v663 = vadd.f32 %v318, %v662
        %664 = vmatmul.f32.gmra.mxu0 %v457
        %v665 = vpop.f32.mrf.mxu0
        %v666 = vadd.f32 %v318, %v665
        %667 = vmatmul.f32.gmra.mxu0 %v460
        %v668 = vpop.f32.mrf.mxu0
        %v669 = vadd.f32 %v318, %v668
        %670 = vmatmul.f32.gmra.mxu0 %v463
        %v671 = vpop.f32.mrf.mxu0
        %v672 = vadd.f32 %v318, %v671
        %673 = vmatmul.f32.gmra.mxu0 %v466
        %v674 = vpop.f32.mrf.mxu0
        %v675 = vadd.f32 %v318, %v674
        %676 = vmatmul.f32.gmra.mxu0 %v469
        %v677 = vpop.f32.mrf.mxu0
        %v678 = vadd.f32 %v318, %v677
        %679 = vmatmul.f32.gmra.mxu0 %v472
        %v680 = vpop.f32.mrf.mxu0
        %v681 = vadd.f32 %v318, %v680
        %682 = vmatmul.f32.gmra.mxu0 %v475
        %v683 = vpop.f32.mrf.mxu0
        %v684 = vadd.f32 %v318, %v683
        %685 = vmatmul.f32.gmra.mxu0 %v478
        %v686 = vpop.f32.mrf.mxu0
        %v687 = vadd.f32 %v318, %v686
        %688 = vmatmul.f32.gmra.mxu0 %v481
        %v689 = vpop.f32.mrf.mxu0
        %v690 = vadd.f32 %v318, %v689
        %691 = vmatmul.f32.gmra.mxu0 %v484
        %v692 = vpop.f32.mrf.mxu0
        %v693 = vadd.f32 %v318, %v692
        %694 = vmatmul.f32.gmra.mxu0 %v487
        %v695 = vpop.f32.mrf.mxu0
        %v696 = vadd.f32 %v318, %v695
        %697 = vmatmul.f32.gmra.mxu0 %v490
        %v698 = vpop.f32.mrf.mxu0
        %v699 = vadd.f32 %v318, %v698
        %700 = vmatmul.f32.gmra.mxu0 %v493
        %v701 = vpop.f32.mrf.mxu0
        %v702 = vadd.f32 %v318, %v701
        %703 = vmatmul.f32.gmra.mxu0 %v496
        %v704 = vpop.f32.mrf.mxu0
        %v705 = vadd.f32 %v318, %v704
        %706 = vmatmul.f32.gmra.mxu0 %v499
        %v707 = vpop.f32.mrf.mxu0
        %v708 = vadd.f32 %v318, %v707
        %709 = vmatmul.f32.gmra.mxu0 %v502
        %v710 = vpop.f32.mrf.mxu0
        %v711 = vadd.f32 %v318, %v710
        %712 = vmatmul.f32.gmra.mxu0 %v505
        %v713 = vpop.f32.mrf.mxu0
        %v714 = vadd.f32 %v318, %v713
        %715 = vmatmul.f32.gmra.mxu0 %v508
        %v716 = vpop.f32.mrf.mxu0
        %v717 = vadd.f32 %v318, %v716
        %718 = vmatmul.f32.gmra.mxu0 %v511
        %v719 = vpop.f32.mrf.mxu0
        %v720 = vadd.f32 %v318, %v719
        %721 = vdwg.mxu0
        %vm722 = vcmask 785408
        %v723 = vsel %vm722, %v531, 0.0
        %724 = vadd.xlane.f32.xlu0 %v723
        %v725 = vpop.xlane.xlu0 %724
        %v726 = vsel %vm722, %v534, 0.0
        %727 = vadd.xlane.f32.xlu0 %v726
        %v728 = vpop.xlane.xlu0 %727
        %v729 = vsel %vm722, %v537, 0.0
        %730 = vadd.xlane.f32.xlu0 %v729
        %v731 = vpop.xlane.xlu0 %730
        %v732 = vsel %vm722, %v540, 0.0
        %733 = vadd.xlane.f32.xlu0 %v732
        %v734 = vpop.xlane.xlu0 %733
        %v735 = vsel %vm722, %v543, 0.0
        %736 = vadd.xlane.f32.xlu0 %v735
        %v737 = vpop.xlane.xlu0 %736
        %v738 = vsel %vm722, %v546, 0.0
        %739 = vadd.xlane.f32.xlu0 %v738
        %v740 = vpop.xlane.xlu0 %739
        %v741 = vsel %vm722, %v549, 0.0
        %742 = vadd.xlane.f32.xlu0 %v741
        %v743 = vpop.xlane.xlu0 %742
        %v744 = vsel %vm722, %v552, 0.0
        %745 = vadd.xlane.f32.xlu0 %v744
        %v746 = vpop.xlane.xlu0 %745
        %v747 = vsel %vm722, %v555, 0.0
        %748 = vadd.xlane.f32.xlu0 %v747
        %v749 = vpop.xlane.xlu0 %748
        %v750 = vsel %vm722, %v558, 0.0
        %751 = vadd.xlane.f32.xlu0 %v750
        %v752 = vpop.xlane.xlu0 %751
        %v753 = vsel %vm722, %v561, 0.0
        %754 = vadd.xlane.f32.xlu0 %v753
        %v755 = vpop.xlane.xlu0 %754
        %v756 = vsel %vm722, %v564, 0.0
        %757 = vadd.xlane.f32.xlu0 %v756
        %v758 = vpop.xlane.xlu0 %757
        %v759 = vsel %vm722, %v567, 0.0
        %760 = vadd.xlane.f32.xlu0 %v759
        %v761 = vpop.xlane.xlu0 %760
        %v762 = vsel %vm722, %v570, 0.0
        %763 = vadd.xlane.f32.xlu0 %v762
        %v764 = vpop.xlane.xlu0 %763
        %v765 = vsel %vm722, %v573, 0.0
        %766 = vadd.xlane.f32.xlu0 %v765
        %v767 = vpop.xlane.xlu0 %766
        %v768 = vsel %vm722, %v576, 0.0
        %769 = vadd.xlane.f32.xlu0 %v768
        %v770 = vpop.xlane.xlu0 %769
        %v771 = vsel %vm722, %v579, 0.0
        %772 = vadd.xlane.f32.xlu0 %v771
        %v773 = vpop.xlane.xlu0 %772
        %v774 = vsel %vm722, %v582, 0.0
        %775 = vadd.xlane.f32.xlu0 %v774
        %v776 = vpop.xlane.xlu0 %775
        %v777 = vsel %vm722, %v585, 0.0
        %778 = vadd.xlane.f32.xlu0 %v777
        %v779 = vpop.xlane.xlu0 %778
        %v780 = vsel %vm722, %v588, 0.0
        %781 = vadd.xlane.f32.xlu0 %v780
        %v782 = vpop.xlane.xlu0 %781
        %v783 = vsel %vm722, %v591, 0.0
        %784 = vadd.xlane.f32.xlu0 %v783
        %v785 = vpop.xlane.xlu0 %784
        %v786 = vsel %vm722, %v594, 0.0
        %787 = vadd.xlane.f32.xlu0 %v786
        %v788 = vpop.xlane.xlu0 %787
        %v789 = vsel %vm722, %v597, 0.0
        %790 = vadd.xlane.f32.xlu0 %v789
        %v791 = vpop.xlane.xlu0 %790
        %v792 = vsel %vm722, %v600, 0.0
        %793 = vadd.xlane.f32.xlu0 %v792
        %v794 = vpop.xlane.xlu0 %793
        %v795 = vsel %vm722, %v603, 0.0
        %796 = vadd.xlane.f32.xlu0 %v795
        %v797 = vpop.xlane.xlu0 %796
        %v798 = vsel %vm722, %v606, 0.0
        %799 = vadd.xlane.f32.xlu0 %v798
        %v800 = vpop.xlane.xlu0 %799
        %v801 = vsel %vm722, %v609, 0.0
        %802 = vadd.xlane.f32.xlu0 %v801
        %v803 = vpop.xlane.xlu0 %802
        %v804 = vsel %vm722, %v612, 0.0
        %805 = vadd.xlane.f32.xlu0 %v804
        %v806 = vpop.xlane.xlu0 %805
        %v807 = vsel %vm722, %v615, 0.0
        %808 = vadd.xlane.f32.xlu0 %v807
        %v809 = vpop.xlane.xlu0 %808
        %v810 = vsel %vm722, %v618, 0.0
        %811 = vadd.xlane.f32.xlu0 %v810
        %v812 = vpop.xlane.xlu0 %811
        %v813 = vsel %vm722, %v621, 0.0
        %814 = vadd.xlane.f32.xlu0 %v813
        %v815 = vpop.xlane.xlu0 %814
        %v816 = vsel %vm722, %v624, 0.0
        %817 = vadd.xlane.f32.xlu0 %v816
        %v818 = vpop.xlane.xlu0 %817
        %v819 = vsel %vm722, %v627, 0.0
        %820 = vadd.xlane.f32.xlu0 %v819
        %v821 = vpop.xlane.xlu0 %820
        %v822 = vsel %vm722, %v630, 0.0
        %823 = vadd.xlane.f32.xlu0 %v822
        %v824 = vpop.xlane.xlu0 %823
        %v825 = vsel %vm722, %v633, 0.0
        %826 = vadd.xlane.f32.xlu0 %v825
        %v827 = vpop.xlane.xlu0 %826
        %v828 = vsel %vm722, %v636, 0.0
        %829 = vadd.xlane.f32.xlu0 %v828
        %v830 = vpop.xlane.xlu0 %829
        %v831 = vsel %vm722, %v639, 0.0
        %832 = vadd.xlane.f32.xlu0 %v831
        %v833 = vpop.xlane.xlu0 %832
        %v834 = vsel %vm722, %v642, 0.0
        %835 = vadd.xlane.f32.xlu0 %v834
        %v836 = vpop.xlane.xlu0 %835
        %v837 = vsel %vm722, %v645, 0.0
        %838 = vadd.xlane.f32.xlu0 %v837
        %v839 = vpop.xlane.xlu0 %838
        %v840 = vsel %vm722, %v648, 0.0
        %841 = vadd.xlane.f32.xlu0 %v840
        %v842 = vpop.xlane.xlu0 %841
        %v843 = vsel %vm722, %v651, 0.0
        %844 = vadd.xlane.f32.xlu0 %v843
        %v845 = vpop.xlane.xlu0 %844
        %v846 = vsel %vm722, %v654, 0.0
        %847 = vadd.xlane.f32.xlu0 %v846
        %v848 = vpop.xlane.xlu0 %847
        %v849 = vsel %vm722, %v657, 0.0
        %850 = vadd.xlane.f32.xlu0 %v849
        %v851 = vpop.xlane.xlu0 %850
        %v852 = vsel %vm722, %v660, 0.0
        %853 = vadd.xlane.f32.xlu0 %v852
        %v854 = vpop.xlane.xlu0 %853
        %v855 = vsel %vm722, %v663, 0.0
        %856 = vadd.xlane.f32.xlu0 %v855
        %v857 = vpop.xlane.xlu0 %856
        %v858 = vsel %vm722, %v666, 0.0
        %859 = vadd.xlane.f32.xlu0 %v858
        %v860 = vpop.xlane.xlu0 %859
        %v861 = vsel %vm722, %v669, 0.0
        %862 = vadd.xlane.f32.xlu0 %v861
        %v863 = vpop.xlane.xlu0 %862
        %v864 = vsel %vm722, %v672, 0.0
        %865 = vadd.xlane.f32.xlu0 %v864
        %v866 = vpop.xlane.xlu0 %865
        %v867 = vsel %vm722, %v675, 0.0
        %868 = vadd.xlane.f32.xlu0 %v867
        %v869 = vpop.xlane.xlu0 %868
        %v870 = vsel %vm722, %v678, 0.0
        %871 = vadd.xlane.f32.xlu0 %v870
        %v872 = vpop.xlane.xlu0 %871
        %v873 = vsel %vm722, %v681, 0.0
        %874 = vadd.xlane.f32.xlu0 %v873
        %v875 = vpop.xlane.xlu0 %874
        %v876 = vsel %vm722, %v684, 0.0
        %877 = vadd.xlane.f32.xlu0 %v876
        %v878 = vpop.xlane.xlu0 %877
        %v879 = vsel %vm722, %v687, 0.0
        %880 = vadd.xlane.f32.xlu0 %v879
        %v881 = vpop.xlane.xlu0 %880
        %v882 = vsel %vm722, %v690, 0.0
        %883 = vadd.xlane.f32.xlu0 %v882
        %v884 = vpop.xlane.xlu0 %883
        %v885 = vsel %vm722, %v693, 0.0
        %886 = vadd.xlane.f32.xlu0 %v885
        %v887 = vpop.xlane.xlu0 %886
        %v888 = vsel %vm722, %v696, 0.0
        %889 = vadd.xlane.f32.xlu0 %v888
        %v890 = vpop.xlane.xlu0 %889
        %v891 = vsel %vm722, %v699, 0.0
        %892 = vadd.xlane.f32.xlu0 %v891
        %v893 = vpop.xlane.xlu0 %892
        %v894 = vsel %vm722, %v702, 0.0
        %895 = vadd.xlane.f32.xlu0 %v894
        %v896 = vpop.xlane.xlu0 %895
        %v897 = vsel %vm722, %v705, 0.0
        %898 = vadd.xlane.f32.xlu0 %v897
        %v899 = vpop.xlane.xlu0 %898
        %v900 = vsel %vm722, %v708, 0.0
        %901 = vadd.xlane.f32.xlu0 %v900
        %v902 = vpop.xlane.xlu0 %901
        %v903 = vsel %vm722, %v711, 0.0
        %904 = vadd.xlane.f32.xlu0 %v903
        %v905 = vpop.xlane.xlu0 %904
        %v906 = vsel %vm722, %v714, 0.0
        %907 = vadd.xlane.f32.xlu0 %v906
        %v908 = vpop.xlane.xlu0 %907
        %v909 = vsel %vm722, %v717, 0.0
        %910 = vadd.xlane.f32.xlu0 %v909
        %v911 = vpop.xlane.xlu0 %910
        %v912 = vsel %vm722, %v720, 0.0
        %913 = vadd.xlane.f32.xlu0 %v912
        %v914 = vpop.xlane.xlu0 %913
        %v915 = vrcp.pop 96.0
        %v916 = vmul.f32 96.0, %v915
        %v917 = vsub.f32 1.0, %v916
        %v918 = vmul.f32 %v915, %v917
        %v919 = vadd.f32 %v915, %v918
        %vm920 = vweird.f32 %v915
        %v921 = vsel %vm920, %v915, %v919
        %v922 = vmul.f32 %v725, %v921
        %v923 = vmul.f32 %v728, %v921
        %v924 = vmul.f32 %v731, %v921
        %v925 = vmul.f32 %v734, %v921
        %v926 = vmul.f32 %v737, %v921
        %v927 = vmul.f32 %v740, %v921
        %v928 = vmul.f32 %v743, %v921
        %v929 = vmul.f32 %v746, %v921
        %v930 = vmul.f32 %v749, %v921
        %v931 = vmul.f32 %v752, %v921
        %v932 = vmul.f32 %v755, %v921
        %v933 = vmul.f32 %v758, %v921
        %v934 = vmul.f32 %v761, %v921
        %v935 = vmul.f32 %v764, %v921
        %v936 = vmul.f32 %v767, %v921
        %v937 = vmul.f32 %v770, %v921
        %v938 = vmul.f32 %v773, %v921
        %v939 = vmul.f32 %v776, %v921
        %v940 = vmul.f32 %v779, %v921
        %v941 = vmul.f32 %v782, %v921
        %v942 = vmul.f32 %v785, %v921
        %v943 = vmul.f32 %v788, %v921
        %v944 = vmul.f32 %v791, %v921
        %v945 = vmul.f32 %v794, %v921
        %v946 = vmul.f32 %v797, %v921
        %v947 = vmul.f32 %v800, %v921
        %v948 = vmul.f32 %v803, %v921
        %v949 = vmul.f32 %v806, %v921
        %v950 = vmul.f32 %v809, %v921
        %v951 = vmul.f32 %v812, %v921
        %v952 = vmul.f32 %v815, %v921
        %v953 = vmul.f32 %v818, %v921
        %v954 = vmul.f32 %v821, %v921
        %v955 = vmul.f32 %v824, %v921
        %v956 = vmul.f32 %v827, %v921
        %v957 = vmul.f32 %v830, %v921
        %v958 = vmul.f32 %v833, %v921
        %v959 = vmul.f32 %v836, %v921
        %v960 = vmul.f32 %v839, %v921
        %v961 = vmul.f32 %v842, %v921
        %v962 = vmul.f32 %v845, %v921
        %v963 = vmul.f32 %v848, %v921
        %v964 = vmul.f32 %v851, %v921
        %v965 = vmul.f32 %v854, %v921
        %v966 = vmul.f32 %v857, %v921
        %v967 = vmul.f32 %v860, %v921
        %v968 = vmul.f32 %v863, %v921
        %v969 = vmul.f32 %v866, %v921
        %v970 = vmul.f32 %v869, %v921
        %v971 = vmul.f32 %v872, %v921
        %v972 = vmul.f32 %v875, %v921
        %v973 = vmul.f32 %v878, %v921
        %v974 = vmul.f32 %v881, %v921
        %v975 = vmul.f32 %v884, %v921
        %v976 = vmul.f32 %v887, %v921
        %v977 = vmul.f32 %v890, %v921
        %v978 = vmul.f32 %v893, %v921
        %v979 = vmul.f32 %v896, %v921
        %v980 = vmul.f32 %v899, %v921
        %v981 = vmul.f32 %v902, %v921
        %v982 = vmul.f32 %v905, %v921
        %v983 = vmul.f32 %v908, %v921
        %v984 = vmul.f32 %v911, %v921
        %v985 = vmul.f32 %v914, %v921
        %v986 = vsub.f32 %v531, %v922
        %v987 = vsub.f32 %v534, %v923
        %v988 = vsub.f32 %v537, %v924
        %v989 = vsub.f32 %v540, %v925
        %v990 = vsub.f32 %v543, %v926
        %v991 = vsub.f32 %v546, %v927
        %v992 = vsub.f32 %v549, %v928
        %v993 = vsub.f32 %v552, %v929
        %v994 = vsub.f32 %v555, %v930
        %v995 = vsub.f32 %v558, %v931
        %v996 = vsub.f32 %v561, %v932
        %v997 = vsub.f32 %v564, %v933
        %v998 = vsub.f32 %v567, %v934
        %v999 = vsub.f32 %v570, %v935
        %v1000 = vsub.f32 %v573, %v936
        %v1001 = vsub.f32 %v576, %v937
        %v1002 = vsub.f32 %v579, %v938
        %v1003 = vsub.f32 %v582, %v939
        %v1004 = vsub.f32 %v585, %v940
        %v1005 = vsub.f32 %v588, %v941
        %v1006 = vsub.f32 %v591, %v942
        %v1007 = vsub.f32 %v594, %v943
        %v1008 = vsub.f32 %v597, %v944
        %v1009 = vsub.f32 %v600, %v945
        %v1010 = vsub.f32 %v603, %v946
        %v1011 = vsub.f32 %v606, %v947
        %v1012 = vsub.f32 %v609, %v948
        %v1013 = vsub.f32 %v612, %v949
        %v1014 = vsub.f32 %v615, %v950
        %v1015 = vsub.f32 %v618, %v951
        %v1016 = vsub.f32 %v621, %v952
        %v1017 = vsub.f32 %v624, %v953
        %v1018 = vsub.f32 %v627, %v954
        %v1019 = vsub.f32 %v630, %v955
        %v1020 = vsub.f32 %v633, %v956
        %v1021 = vsub.f32 %v636, %v957
        %v1022 = vsub.f32 %v639, %v958
        %v1023 = vsub.f32 %v642, %v959
        %v1024 = vsub.f32 %v645, %v960
        %v1025 = vsub.f32 %v648, %v961
        %v1026 = vsub.f32 %v651, %v962
        %v1027 = vsub.f32 %v654, %v963
        %v1028 = vsub.f32 %v657, %v964
        %v1029 = vsub.f32 %v660, %v965
        %v1030 = vsub.f32 %v663, %v966
        %v1031 = vsub.f32 %v666, %v967
        %v1032 = vsub.f32 %v669, %v968
        %v1033 = vsub.f32 %v672, %v969
        %v1034 = vsub.f32 %v675, %v970
        %v1035 = vsub.f32 %v678, %v971
        %v1036 = vsub.f32 %v681, %v972
        %v1037 = vsub.f32 %v684, %v973
        %v1038 = vsub.f32 %v687, %v974
        %v1039 = vsub.f32 %v690, %v975
        %v1040 = vsub.f32 %v693, %v976
        %v1041 = vsub.f32 %v696, %v977
        %v1042 = vsub.f32 %v699, %v978
        %v1043 = vsub.f32 %v702, %v979
        %v1044 = vsub.f32 %v705, %v980
        %v1045 = vsub.f32 %v708, %v981
        %v1046 = vsub.f32 %v711, %v982
        %v1047 = vsub.f32 %v714, %v983
        %v1048 = vsub.f32 %v717, %v984
        %v1049 = vsub.f32 %v720, %v985
        %v1050 = vmul.f32 %v986, %v986
        %v1051 = vmul.f32 %v987, %v987
        %v1052 = vmul.f32 %v988, %v988
        %v1053 = vmul.f32 %v989, %v989
        %v1054 = vmul.f32 %v990, %v990
        %v1055 = vmul.f32 %v991, %v991
        %v1056 = vmul.f32 %v992, %v992
        %v1057 = vmul.f32 %v993, %v993
        %v1058 = vmul.f32 %v994, %v994
        %v1059 = vmul.f32 %v995, %v995
        %v1060 = vmul.f32 %v996, %v996
        %v1061 = vmul.f32 %v997, %v997
        %v1062 = vmul.f32 %v998, %v998
        %v1063 = vmul.f32 %v999, %v999
        %v1064 = vmul.f32 %v1000, %v1000
        %v1065 = vmul.f32 %v1001, %v1001
        %v1066 = vmul.f32 %v1002, %v1002
        %v1067 = vmul.f32 %v1003, %v1003
        %v1068 = vmul.f32 %v1004, %v1004
        %v1069 = vmul.f32 %v1005, %v1005
        %v1070 = vmul.f32 %v1006, %v1006
        %v1071 = vmul.f32 %v1007, %v1007
        %v1072 = vmul.f32 %v1008, %v1008
        %v1073 = vmul.f32 %v1009, %v1009
        %v1074 = vmul.f32 %v1010, %v1010
        %v1075 = vmul.f32 %v1011, %v1011
        %v1076 = vmul.f32 %v1012, %v1012
        %v1077 = vmul.f32 %v1013, %v1013
        %v1078 = vmul.f32 %v1014, %v1014
        %v1079 = vmul.f32 %v1015, %v1015
        %v1080 = vmul.f32 %v1016, %v1016
        %v1081 = vmul.f32 %v1017, %v1017
        %v1082 = vmul.f32 %v1018, %v1018
        %v1083 = vmul.f32 %v1019, %v1019
        %v1084 = vmul.f32 %v1020, %v1020
        %v1085 = vmul.f32 %v1021, %v1021
        %v1086 = vmul.f32 %v1022, %v1022
        %v1087 = vmul.f32 %v1023, %v1023
        %v1088 = vmul.f32 %v1024, %v1024
        %v1089 = vmul.f32 %v1025, %v1025
        %v1090 = vmul.f32 %v1026, %v1026
        %v1091 = vmul.f32 %v1027, %v1027
        %v1092 = vmul.f32 %v1028, %v1028
        %v1093 = vmul.f32 %v1029, %v1029
        %v1094 = vmul.f32 %v1030, %v1030
        %v1095 = vmul.f32 %v1031, %v1031
        %v1096 = vmul.f32 %v1032, %v1032
        %v1097 = vmul.f32 %v1033, %v1033
        %v1098 = vmul.f32 %v1034, %v1034
        %v1099 = vmul.f32 %v1035, %v1035
        %v1100 = vmul.f32 %v1036, %v1036
        %v1101 = vmul.f32 %v1037, %v1037
        %v1102 = vmul.f32 %v1038, %v1038
        %v1103 = vmul.f32 %v1039, %v1039
        %v1104 = vmul.f32 %v1040, %v1040
        %v1105 = vmul.f32 %v1041, %v1041
        %v1106 = vmul.f32 %v1042, %v1042
        %v1107 = vmul.f32 %v1043, %v1043
        %v1108 = vmul.f32 %v1044, %v1044
        %v1109 = vmul.f32 %v1045, %v1045
        %v1110 = vmul.f32 %v1046, %v1046
        %v1111 = vmul.f32 %v1047, %v1047
        %v1112 = vmul.f32 %v1048, %v1048
        %v1113 = vmul.f32 %v1049, %v1049
        %v1114 = vsel %vm722, %v1050, 0.0
        %1115 = vadd.xlane.f32.xlu0 %v1114
        %v1116 = vpop.xlane.xlu0 %1115
        %v1117 = vsel %vm722, %v1051, 0.0
        %1118 = vadd.xlane.f32.xlu0 %v1117
        %v1119 = vpop.xlane.xlu0 %1118
        %v1120 = vsel %vm722, %v1052, 0.0
        %1121 = vadd.xlane.f32.xlu0 %v1120
        %v1122 = vpop.xlane.xlu0 %1121
        %v1123 = vsel %vm722, %v1053, 0.0
        %1124 = vadd.xlane.f32.xlu0 %v1123
        %v1125 = vpop.xlane.xlu0 %1124
        %v1126 = vsel %vm722, %v1054, 0.0
        %1127 = vadd.xlane.f32.xlu0 %v1126
        %v1128 = vpop.xlane.xlu0 %1127
        %v1129 = vsel %vm722, %v1055, 0.0
        %1130 = vadd.xlane.f32.xlu0 %v1129
        %v1131 = vpop.xlane.xlu0 %1130
        %v1132 = vsel %vm722, %v1056, 0.0
        %1133 = vadd.xlane.f32.xlu0 %v1132
        %v1134 = vpop.xlane.xlu0 %1133
        %v1135 = vsel %vm722, %v1057, 0.0
        %1136 = vadd.xlane.f32.xlu0 %v1135
        %v1137 = vpop.xlane.xlu0 %1136
        %v1138 = vsel %vm722, %v1058, 0.0
        %1139 = vadd.xlane.f32.xlu0 %v1138
        %v1140 = vpop.xlane.xlu0 %1139
        %v1141 = vsel %vm722, %v1059, 0.0
        %1142 = vadd.xlane.f32.xlu0 %v1141
        %v1143 = vpop.xlane.xlu0 %1142
        %v1144 = vsel %vm722, %v1060, 0.0
        %1145 = vadd.xlane.f32.xlu0 %v1144
        %v1146 = vpop.xlane.xlu0 %1145
        %v1147 = vsel %vm722, %v1061, 0.0
        %1148 = vadd.xlane.f32.xlu0 %v1147
        %v1149 = vpop.xlane.xlu0 %1148
        %v1150 = vsel %vm722, %v1062, 0.0
        %1151 = vadd.xlane.f32.xlu0 %v1150
        %v1152 = vpop.xlane.xlu0 %1151
        %v1153 = vsel %vm722, %v1063, 0.0
        %1154 = vadd.xlane.f32.xlu0 %v1153
        %v1155 = vpop.xlane.xlu0 %1154
        %v1156 = vsel %vm722, %v1064, 0.0
        %1157 = vadd.xlane.f32.xlu0 %v1156
        %v1158 = vpop.xlane.xlu0 %1157
        %v1159 = vsel %vm722, %v1065, 0.0
        %1160 = vadd.xlane.f32.xlu0 %v1159
        %v1161 = vpop.xlane.xlu0 %1160
        %v1162 = vsel %vm722, %v1066, 0.0
        %1163 = vadd.xlane.f32.xlu0 %v1162
        %v1164 = vpop.xlane.xlu0 %1163
        %v1165 = vsel %vm722, %v1067, 0.0
        %1166 = vadd.xlane.f32.xlu0 %v1165
        %v1167 = vpop.xlane.xlu0 %1166
        %v1168 = vsel %vm722, %v1068, 0.0
        %1169 = vadd.xlane.f32.xlu0 %v1168
        %v1170 = vpop.xlane.xlu0 %1169
        %v1171 = vsel %vm722, %v1069, 0.0
        %1172 = vadd.xlane.f32.xlu0 %v1171
        %v1173 = vpop.xlane.xlu0 %1172
        %v1174 = vsel %vm722, %v1070, 0.0
        %1175 = vadd.xlane.f32.xlu0 %v1174
        %v1176 = vpop.xlane.xlu0 %1175
        %v1177 = vsel %vm722, %v1071, 0.0
        %1178 = vadd.xlane.f32.xlu0 %v1177
        %v1179 = vpop.xlane.xlu0 %1178
        %v1180 = vsel %vm722, %v1072, 0.0
        %1181 = vadd.xlane.f32.xlu0 %v1180
        %v1182 = vpop.xlane.xlu0 %1181
        %v1183 = vsel %vm722, %v1073, 0.0
        %1184 = vadd.xlane.f32.xlu0 %v1183
        %v1185 = vpop.xlane.xlu0 %1184
        %v1186 = vsel %vm722, %v1074, 0.0
        %1187 = vadd.xlane.f32.xlu0 %v1186
        %v1188 = vpop.xlane.xlu0 %1187
        %v1189 = vsel %vm722, %v1075, 0.0
        %1190 = vadd.xlane.f32.xlu0 %v1189
        %v1191 = vpop.xlane.xlu0 %1190
        %v1192 = vsel %vm722, %v1076, 0.0
        %1193 = vadd.xlane.f32.xlu0 %v1192
        %v1194 = vpop.xlane.xlu0 %1193
        %v1195 = vsel %vm722, %v1077, 0.0
        %1196 = vadd.xlane.f32.xlu0 %v1195
        %v1197 = vpop.xlane.xlu0 %1196
        %v1198 = vsel %vm722, %v1078, 0.0
        %1199 = vadd.xlane.f32.xlu0 %v1198
        %v1200 = vpop.xlane.xlu0 %1199
        %v1201 = vsel %vm722, %v1079, 0.0
        %1202 = vadd.xlane.f32.xlu0 %v1201
        %v1203 = vpop.xlane.xlu0 %1202
        %v1204 = vsel %vm722, %v1080, 0.0
        %1205 = vadd.xlane.f32.xlu0 %v1204
        %v1206 = vpop.xlane.xlu0 %1205
        %v1207 = vsel %vm722, %v1081, 0.0
        %1208 = vadd.xlane.f32.xlu0 %v1207
        %v1209 = vpop.xlane.xlu0 %1208
        %v1210 = vsel %vm722, %v1082, 0.0
        %1211 = vadd.xlane.f32.xlu0 %v1210
        %v1212 = vpop.xlane.xlu0 %1211
        %v1213 = vsel %vm722, %v1083, 0.0
        %1214 = vadd.xlane.f32.xlu0 %v1213
        %v1215 = vpop.xlane.xlu0 %1214
        %v1216 = vsel %vm722, %v1084, 0.0
        %1217 = vadd.xlane.f32.xlu0 %v1216
        %v1218 = vpop.xlane.xlu0 %1217
        %v1219 = vsel %vm722, %v1085, 0.0
        %1220 = vadd.xlane.f32.xlu0 %v1219
        %v1221 = vpop.xlane.xlu0 %1220
        %v1222 = vsel %vm722, %v1086, 0.0
        %1223 = vadd.xlane.f32.xlu0 %v1222
        %v1224 = vpop.xlane.xlu0 %1223
        %v1225 = vsel %vm722, %v1087, 0.0
        %1226 = vadd.xlane.f32.xlu0 %v1225
        %v1227 = vpop.xlane.xlu0 %1226
        %v1228 = vsel %vm722, %v1088, 0.0
        %1229 = vadd.xlane.f32.xlu0 %v1228
        %v1230 = vpop.xlane.xlu0 %1229
        %v1231 = vsel %vm722, %v1089, 0.0
        %1232 = vadd.xlane.f32.xlu0 %v1231
        %v1233 = vpop.xlane.xlu0 %1232
        %v1234 = vsel %vm722, %v1090, 0.0
        %1235 = vadd.xlane.f32.xlu0 %v1234
        %v1236 = vpop.xlane.xlu0 %1235
        %v1237 = vsel %vm722, %v1091, 0.0
        %1238 = vadd.xlane.f32.xlu0 %v1237
        %v1239 = vpop.xlane.xlu0 %1238
        %v1240 = vsel %vm722, %v1092, 0.0
        %1241 = vadd.xlane.f32.xlu0 %v1240
        %v1242 = vpop.xlane.xlu0 %1241
        %v1243 = vsel %vm722, %v1093, 0.0
        %1244 = vadd.xlane.f32.xlu0 %v1243
        %v1245 = vpop.xlane.xlu0 %1244
        %v1246 = vsel %vm722, %v1094, 0.0
        %1247 = vadd.xlane.f32.xlu0 %v1246
        %v1248 = vpop.xlane.xlu0 %1247
        %v1249 = vsel %vm722, %v1095, 0.0
        %1250 = vadd.xlane.f32.xlu0 %v1249
        %v1251 = vpop.xlane.xlu0 %1250
        %v1252 = vsel %vm722, %v1096, 0.0
        %1253 = vadd.xlane.f32.xlu0 %v1252
        %v1254 = vpop.xlane.xlu0 %1253
        %v1255 = vsel %vm722, %v1097, 0.0
        %1256 = vadd.xlane.f32.xlu0 %v1255
        %v1257 = vpop.xlane.xlu0 %1256
        %v1258 = vsel %vm722, %v1098, 0.0
        %1259 = vadd.xlane.f32.xlu0 %v1258
        %v1260 = vpop.xlane.xlu0 %1259
        %v1261 = vsel %vm722, %v1099, 0.0
        %1262 = vadd.xlane.f32.xlu0 %v1261
        %v1263 = vpop.xlane.xlu0 %1262
        %v1264 = vsel %vm722, %v1100, 0.0
        %1265 = vadd.xlane.f32.xlu0 %v1264
        %v1266 = vpop.xlane.xlu0 %1265
        %v1267 = vsel %vm722, %v1101, 0.0
        %1268 = vadd.xlane.f32.xlu0 %v1267
        %v1269 = vpop.xlane.xlu0 %1268
        %v1270 = vsel %vm722, %v1102, 0.0
        %1271 = vadd.xlane.f32.xlu0 %v1270
        %v1272 = vpop.xlane.xlu0 %1271
        %v1273 = vsel %vm722, %v1103, 0.0
        %1274 = vadd.xlane.f32.xlu0 %v1273
        %v1275 = vpop.xlane.xlu0 %1274
        %v1276 = vsel %vm722, %v1104, 0.0
        %1277 = vadd.xlane.f32.xlu0 %v1276
        %v1278 = vpop.xlane.xlu0 %1277
        %v1279 = vsel %vm722, %v1105, 0.0
        %1280 = vadd.xlane.f32.xlu0 %v1279
        %v1281 = vpop.xlane.xlu0 %1280
        %v1282 = vsel %vm722, %v1106, 0.0
        %1283 = vadd.xlane.f32.xlu0 %v1282
        %v1284 = vpop.xlane.xlu0 %1283
        %v1285 = vsel %vm722, %v1107, 0.0
        %1286 = vadd.xlane.f32.xlu0 %v1285
        %v1287 = vpop.xlane.xlu0 %1286
        %v1288 = vsel %vm722, %v1108, 0.0
        %1289 = vadd.xlane.f32.xlu0 %v1288
        %v1290 = vpop.xlane.xlu0 %1289
        %v1291 = vsel %vm722, %v1109, 0.0
        %1292 = vadd.xlane.f32.xlu0 %v1291
        %v1293 = vpop.xlane.xlu0 %1292
        %v1294 = vsel %vm722, %v1110, 0.0
        %1295 = vadd.xlane.f32.xlu0 %v1294
        %v1296 = vpop.xlane.xlu0 %1295
        %v1297 = vsel %vm722, %v1111, 0.0
        %1298 = vadd.xlane.f32.xlu0 %v1297
        %v1299 = vpop.xlane.xlu0 %1298
        %v1300 = vsel %vm722, %v1112, 0.0
        %1301 = vadd.xlane.f32.xlu0 %v1300
        %v1302 = vpop.xlane.xlu0 %1301
        %v1303 = vsel %vm722, %v1113, 0.0
        %1304 = vadd.xlane.f32.xlu0 %v1303
        %v1305 = vpop.xlane.xlu0 %1304
        %v1306 = vmul.f32 %v1116, %v921
        %v1307 = vmul.f32 %v1119, %v921
        %v1308 = vmul.f32 %v1122, %v921
        %v1309 = vmul.f32 %v1125, %v921
        %v1310 = vmul.f32 %v1128, %v921
        %v1311 = vmul.f32 %v1131, %v921
        %v1312 = vmul.f32 %v1134, %v921
        %v1313 = vmul.f32 %v1137, %v921
        %v1314 = vmul.f32 %v1140, %v921
        %v1315 = vmul.f32 %v1143, %v921
        %v1316 = vmul.f32 %v1146, %v921
        %v1317 = vmul.f32 %v1149, %v921
        %v1318 = vmul.f32 %v1152, %v921
        %v1319 = vmul.f32 %v1155, %v921
        %v1320 = vmul.f32 %v1158, %v921
        %v1321 = vmul.f32 %v1161, %v921
        %v1322 = vmul.f32 %v1164, %v921
        %v1323 = vmul.f32 %v1167, %v921
        %v1324 = vmul.f32 %v1170, %v921
        %v1325 = vmul.f32 %v1173, %v921
        %v1326 = vmul.f32 %v1176, %v921
        %v1327 = vmul.f32 %v1179, %v921
        %v1328 = vmul.f32 %v1182, %v921
        %v1329 = vmul.f32 %v1185, %v921
        %v1330 = vmul.f32 %v1188, %v921
        %v1331 = vmul.f32 %v1191, %v921
        %v1332 = vmul.f32 %v1194, %v921
        %v1333 = vmul.f32 %v1197, %v921
        %v1334 = vmul.f32 %v1200, %v921
        %v1335 = vmul.f32 %v1203, %v921
        %v1336 = vmul.f32 %v1206, %v921
        %v1337 = vmul.f32 %v1209, %v921
        %v1338 = vmul.f32 %v1212, %v921
        %v1339 = vmul.f32 %v1215, %v921
        %v1340 = vmul.f32 %v1218, %v921
        %v1341 = vmul.f32 %v1221, %v921
        %v1342 = vmul.f32 %v1224, %v921
        %v1343 = vmul.f32 %v1227, %v921
        %v1344 = vmul.f32 %v1230, %v921
        %v1345 = vmul.f32 %v1233, %v921
        %v1346 = vmul.f32 %v1236, %v921
        %v1347 = vmul.f32 %v1239, %v921
        %v1348 = vmul.f32 %v1242, %v921
        %v1349 = vmul.f32 %v1245, %v921
        %v1350 = vmul.f32 %v1248, %v921
        %v1351 = vmul.f32 %v1251, %v921
        %v1352 = vmul.f32 %v1254, %v921
        %v1353 = vmul.f32 %v1257, %v921
        %v1354 = vmul.f32 %v1260, %v921
        %v1355 = vmul.f32 %v1263, %v921
        %v1356 = vmul.f32 %v1266, %v921
        %v1357 = vmul.f32 %v1269, %v921
        %v1358 = vmul.f32 %v1272, %v921
        %v1359 = vmul.f32 %v1275, %v921
        %v1360 = vmul.f32 %v1278, %v921
        %v1361 = vmul.f32 %v1281, %v921
        %v1362 = vmul.f32 %v1284, %v921
        %v1363 = vmul.f32 %v1287, %v921
        %v1364 = vmul.f32 %v1290, %v921
        %v1365 = vmul.f32 %v1293, %v921
        %v1366 = vmul.f32 %v1296, %v921
        %v1367 = vmul.f32 %v1299, %v921
        %v1368 = vmul.f32 %v1302, %v921
        %v1369 = vmul.f32 %v1305, %v921
        %v1370 = vadd.f32 %v1306, 1e-05
        %v1371 = vadd.f32 %v1307, 1e-05
        %v1372 = vadd.f32 %v1308, 1e-05
        %v1373 = vadd.f32 %v1309, 1e-05
        %v1374 = vadd.f32 %v1310, 1e-05
        %v1375 = vadd.f32 %v1311, 1e-05
        %v1376 = vadd.f32 %v1312, 1e-05
        %v1377 = vadd.f32 %v1313, 1e-05
        %v1378 = vadd.f32 %v1314, 1e-05
        %v1379 = vadd.f32 %v1315, 1e-05
        %v1380 = vadd.f32 %v1316, 1e-05
        %v1381 = vadd.f32 %v1317, 1e-05
        %v1382 = vadd.f32 %v1318, 1e-05
        %v1383 = vadd.f32 %v1319, 1e-05
        %v1384 = vadd.f32 %v1320, 1e-05
        %v1385 = vadd.f32 %v1321, 1e-05
        %v1386 = vadd.f32 %v1322, 1e-05
        %v1387 = vadd.f32 %v1323, 1e-05
        %v1388 = vadd.f32 %v1324, 1e-05
        %v1389 = vadd.f32 %v1325, 1e-05
        %v1390 = vadd.f32 %v1326, 1e-05
        %v1391 = vadd.f32 %v1327, 1e-05
        %v1392 = vadd.f32 %v1328, 1e-05
        %v1393 = vadd.f32 %v1329, 1e-05
        %v1394 = vadd.f32 %v1330, 1e-05
        %v1395 = vadd.f32 %v1331, 1e-05
        %v1396 = vadd.f32 %v1332, 1e-05
        %v1397 = vadd.f32 %v1333, 1e-05
        %v1398 = vadd.f32 %v1334, 1e-05
        %v1399 = vadd.f32 %v1335, 1e-05
        %v1400 = vadd.f32 %v1336, 1e-05
        %v1401 = vadd.f32 %v1337, 1e-05
        %v1402 = vadd.f32 %v1338, 1e-05
        %v1403 = vadd.f32 %v1339, 1e-05
        %v1404 = vadd.f32 %v1340, 1e-05
        %v1405 = vadd.f32 %v1341, 1e-05
        %v1406 = vadd.f32 %v1342, 1e-05
        %v1407 = vadd.f32 %v1343, 1e-05
        %v1408 = vadd.f32 %v1344, 1e-05
        %v1409 = vadd.f32 %v1345, 1e-05
        %v1410 = vadd.f32 %v1346, 1e-05
        %v1411 = vadd.f32 %v1347, 1e-05
        %v1412 = vadd.f32 %v1348, 1e-05
        %v1413 = vadd.f32 %v1349, 1e-05
        %v1414 = vadd.f32 %v1350, 1e-05
        %v1415 = vadd.f32 %v1351, 1e-05
        %v1416 = vadd.f32 %v1352, 1e-05
        %v1417 = vadd.f32 %v1353, 1e-05
        %v1418 = vadd.f32 %v1354, 1e-05
        %v1419 = vadd.f32 %v1355, 1e-05
        %v1420 = vadd.f32 %v1356, 1e-05
        %v1421 = vadd.f32 %v1357, 1e-05
        %v1422 = vadd.f32 %v1358, 1e-05
        %v1423 = vadd.f32 %v1359, 1e-05
        %v1424 = vadd.f32 %v1360, 1e-05
        %v1425 = vadd.f32 %v1361, 1e-05
        %v1426 = vadd.f32 %v1362, 1e-05
        %v1427 = vadd.f32 %v1363, 1e-05
        %v1428 = vadd.f32 %v1364, 1e-05
        %v1429 = vadd.f32 %v1365, 1e-05
        %v1430 = vadd.f32 %v1366, 1e-05
        %v1431 = vadd.f32 %v1367, 1e-05
        %v1432 = vadd.f32 %v1368, 1e-05
        %v1433 = vadd.f32 %v1369, 1e-05
        %v1434 = vrsqrt.pop %v1370
        %v1435 = vmul.f32 %v1434, %v1370
        %v1436 = vmul.f32 %v1435, %v1434
        %v1437 = vmul.f32 0.5, %v1436
        %v1438 = vsub.f32 1.5, %v1437
        %v1439 = vmul.f32 %v1434, %v1438
        %vm1440 = vweird.f32 %v1370
        %vm1441 = vweird.f32 %v1434
        %vm1442 = vmor %vm1440, %vm1441
        %v1443 = vsel %vm1442, %v1434, %v1439
        %v1444 = vrsqrt.pop %v1371
        %v1445 = vmul.f32 %v1444, %v1371
        %v1446 = vmul.f32 %v1445, %v1444
        %v1447 = vmul.f32 0.5, %v1446
        %v1448 = vsub.f32 1.5, %v1447
        %v1449 = vmul.f32 %v1444, %v1448
        %vm1450 = vweird.f32 %v1371
        %vm1451 = vweird.f32 %v1444
        %vm1452 = vmor %vm1450, %vm1451
        %v1453 = vsel %vm1452, %v1444, %v1449
        %v1454 = vrsqrt.pop %v1372
        %v1455 = vmul.f32 %v1454, %v1372
        %v1456 = vmul.f32 %v1455, %v1454
        %v1457 = vmul.f32 0.5, %v1456
        %v1458 = vsub.f32 1.5, %v1457
        %v1459 = vmul.f32 %v1454, %v1458
        %vm1460 = vweird.f32 %v1372
        %vm1461 = vweird.f32 %v1454
        %vm1462 = vmor %vm1460, %vm1461
        %v1463 = vsel %vm1462, %v1454, %v1459
        %v1464 = vrsqrt.pop %v1373
        %v1465 = vmul.f32 %v1464, %v1373
        %v1466 = vmul.f32 %v1465, %v1464
        %v1467 = vmul.f32 0.5, %v1466
        %v1468 = vsub.f32 1.5, %v1467
        %v1469 = vmul.f32 %v1464, %v1468
        %vm1470 = vweird.f32 %v1373
        %vm1471 = vweird.f32 %v1464
        %vm1472 = vmor %vm1470, %vm1471
        %v1473 = vsel %vm1472, %v1464, %v1469
        %v1474 = vrsqrt.pop %v1374
        %v1475 = vmul.f32 %v1474, %v1374
        %v1476 = vmul.f32 %v1475, %v1474
        %v1477 = vmul.f32 0.5, %v1476
        %v1478 = vsub.f32 1.5, %v1477
        %v1479 = vmul.f32 %v1474, %v1478
        %vm1480 = vweird.f32 %v1374
        %vm1481 = vweird.f32 %v1474
        %vm1482 = vmor %vm1480, %vm1481
        %v1483 = vsel %vm1482, %v1474, %v1479
        %v1484 = vrsqrt.pop %v1375
        %v1485 = vmul.f32 %v1484, %v1375
        %v1486 = vmul.f32 %v1485, %v1484
        %v1487 = vmul.f32 0.5, %v1486
        %v1488 = vsub.f32 1.5, %v1487
        %v1489 = vmul.f32 %v1484, %v1488
        %vm1490 = vweird.f32 %v1375
        %vm1491 = vweird.f32 %v1484
        %vm1492 = vmor %vm1490, %vm1491
        %v1493 = vsel %vm1492, %v1484, %v1489
        %v1494 = vrsqrt.pop %v1376
        %v1495 = vmul.f32 %v1494, %v1376
        %v1496 = vmul.f32 %v1495, %v1494
        %v1497 = vmul.f32 0.5, %v1496
        %v1498 = vsub.f32 1.5, %v1497
        %v1499 = vmul.f32 %v1494, %v1498
        %vm1500 = vweird.f32 %v1376
        %vm1501 = vweird.f32 %v1494
        %vm1502 = vmor %vm1500, %vm1501
        %v1503 = vsel %vm1502, %v1494, %v1499
        %v1504 = vrsqrt.pop %v1377
        %v1505 = vmul.f32 %v1504, %v1377
        %v1506 = vmul.f32 %v1505, %v1504
        %v1507 = vmul.f32 0.5, %v1506
        %v1508 = vsub.f32 1.5, %v1507
        %v1509 = vmul.f32 %v1504, %v1508
        %vm1510 = vweird.f32 %v1377
        %vm1511 = vweird.f32 %v1504
        %vm1512 = vmor %vm1510, %vm1511
        %v1513 = vsel %vm1512, %v1504, %v1509
        %v1514 = vrsqrt.pop %v1378
        %v1515 = vmul.f32 %v1514, %v1378
        %v1516 = vmul.f32 %v1515, %v1514
        %v1517 = vmul.f32 0.5, %v1516
        %v1518 = vsub.f32 1.5, %v1517
        %v1519 = vmul.f32 %v1514, %v1518
        %vm1520 = vweird.f32 %v1378
        %vm1521 = vweird.f32 %v1514
        %vm1522 = vmor %vm1520, %vm1521
        %v1523 = vsel %vm1522, %v1514, %v1519
        %v1524 = vrsqrt.pop %v1379
        %v1525 = vmul.f32 %v1524, %v1379
        %v1526 = vmul.f32 %v1525, %v1524
        %v1527 = vmul.f32 0.5, %v1526
        %v1528 = vsub.f32 1.5, %v1527
        %v1529 = vmul.f32 %v1524, %v1528
        %vm1530 = vweird.f32 %v1379
        %vm1531 = vweird.f32 %v1524
        %vm1532 = vmor %vm1530, %vm1531
        %v1533 = vsel %vm1532, %v1524, %v1529
        %v1534 = vrsqrt.pop %v1380
        %v1535 = vmul.f32 %v1534, %v1380
        %v1536 = vmul.f32 %v1535, %v1534
        %v1537 = vmul.f32 0.5, %v1536
        %v1538 = vsub.f32 1.5, %v1537
        %v1539 = vmul.f32 %v1534, %v1538
        %vm1540 = vweird.f32 %v1380
        %vm1541 = vweird.f32 %v1534
        %vm1542 = vmor %vm1540, %vm1541
        %v1543 = vsel %vm1542, %v1534, %v1539
        %v1544 = vrsqrt.pop %v1381
        %v1545 = vmul.f32 %v1544, %v1381
        %v1546 = vmul.f32 %v1545, %v1544
        %v1547 = vmul.f32 0.5, %v1546
        %v1548 = vsub.f32 1.5, %v1547
        %v1549 = vmul.f32 %v1544, %v1548
        %vm1550 = vweird.f32 %v1381
        %vm1551 = vweird.f32 %v1544
        %vm1552 = vmor %vm1550, %vm1551
        %v1553 = vsel %vm1552, %v1544, %v1549
        %v1554 = vrsqrt.pop %v1382
        %v1555 = vmul.f32 %v1554, %v1382
        %v1556 = vmul.f32 %v1555, %v1554
        %v1557 = vmul.f32 0.5, %v1556
        %v1558 = vsub.f32 1.5, %v1557
        %v1559 = vmul.f32 %v1554, %v1558
        %vm1560 = vweird.f32 %v1382
        %vm1561 = vweird.f32 %v1554
        %vm1562 = vmor %vm1560, %vm1561
        %v1563 = vsel %vm1562, %v1554, %v1559
        %v1564 = vrsqrt.pop %v1383
        %v1565 = vmul.f32 %v1564, %v1383
        %v1566 = vmul.f32 %v1565, %v1564
        %v1567 = vmul.f32 0.5, %v1566
        %v1568 = vsub.f32 1.5, %v1567
        %v1569 = vmul.f32 %v1564, %v1568
        %vm1570 = vweird.f32 %v1383
        %vm1571 = vweird.f32 %v1564
        %vm1572 = vmor %vm1570, %vm1571
        %v1573 = vsel %vm1572, %v1564, %v1569
        %v1574 = vrsqrt.pop %v1384
        %v1575 = vmul.f32 %v1574, %v1384
        %v1576 = vmul.f32 %v1575, %v1574
        %v1577 = vmul.f32 0.5, %v1576
        %v1578 = vsub.f32 1.5, %v1577
        %v1579 = vmul.f32 %v1574, %v1578
        %vm1580 = vweird.f32 %v1384
        %vm1581 = vweird.f32 %v1574
        %vm1582 = vmor %vm1580, %vm1581
        %v1583 = vsel %vm1582, %v1574, %v1579
        %v1584 = vrsqrt.pop %v1385
        %v1585 = vmul.f32 %v1584, %v1385
        %v1586 = vmul.f32 %v1585, %v1584
        %v1587 = vmul.f32 0.5, %v1586
        %v1588 = vsub.f32 1.5, %v1587
        %v1589 = vmul.f32 %v1584, %v1588
        %vm1590 = vweird.f32 %v1385
        %vm1591 = vweird.f32 %v1584
        %vm1592 = vmor %vm1590, %vm1591
        %v1593 = vsel %vm1592, %v1584, %v1589
        %v1594 = vrsqrt.pop %v1386
        %v1595 = vmul.f32 %v1594, %v1386
        %v1596 = vmul.f32 %v1595, %v1594
        %v1597 = vmul.f32 0.5, %v1596
        %v1598 = vsub.f32 1.5, %v1597
        %v1599 = vmul.f32 %v1594, %v1598
        %vm1600 = vweird.f32 %v1386
        %vm1601 = vweird.f32 %v1594
        %vm1602 = vmor %vm1600, %vm1601
        %v1603 = vsel %vm1602, %v1594, %v1599
        %v1604 = vrsqrt.pop %v1387
        %v1605 = vmul.f32 %v1604, %v1387
        %v1606 = vmul.f32 %v1605, %v1604
        %v1607 = vmul.f32 0.5, %v1606
        %v1608 = vsub.f32 1.5, %v1607
        %v1609 = vmul.f32 %v1604, %v1608
        %vm1610 = vweird.f32 %v1387
        %vm1611 = vweird.f32 %v1604
        %vm1612 = vmor %vm1610, %vm1611
        %v1613 = vsel %vm1612, %v1604, %v1609
        %v1614 = vrsqrt.pop %v1388
        %v1615 = vmul.f32 %v1614, %v1388
        %v1616 = vmul.f32 %v1615, %v1614
        %v1617 = vmul.f32 0.5, %v1616
        %v1618 = vsub.f32 1.5, %v1617
        %v1619 = vmul.f32 %v1614, %v1618
        %vm1620 = vweird.f32 %v1388
        %vm1621 = vweird.f32 %v1614
        %vm1622 = vmor %vm1620, %vm1621
        %v1623 = vsel %vm1622, %v1614, %v1619
        %v1624 = vrsqrt.pop %v1389
        %v1625 = vmul.f32 %v1624, %v1389
        %v1626 = vmul.f32 %v1625, %v1624
        %v1627 = vmul.f32 0.5, %v1626
        %v1628 = vsub.f32 1.5, %v1627
        %v1629 = vmul.f32 %v1624, %v1628
        %vm1630 = vweird.f32 %v1389
        %vm1631 = vweird.f32 %v1624
        %vm1632 = vmor %vm1630, %vm1631
        %v1633 = vsel %vm1632, %v1624, %v1629
        %v1634 = vrsqrt.pop %v1390
        %v1635 = vmul.f32 %v1634, %v1390
        %v1636 = vmul.f32 %v1635, %v1634
        %v1637 = vmul.f32 0.5, %v1636
        %v1638 = vsub.f32 1.5, %v1637
        %v1639 = vmul.f32 %v1634, %v1638
        %vm1640 = vweird.f32 %v1390
        %vm1641 = vweird.f32 %v1634
        %vm1642 = vmor %vm1640, %vm1641
        %v1643 = vsel %vm1642, %v1634, %v1639
        %v1644 = vrsqrt.pop %v1391
        %v1645 = vmul.f32 %v1644, %v1391
        %v1646 = vmul.f32 %v1645, %v1644
        %v1647 = vmul.f32 0.5, %v1646
        %v1648 = vsub.f32 1.5, %v1647
        %v1649 = vmul.f32 %v1644, %v1648
        %vm1650 = vweird.f32 %v1391
        %vm1651 = vweird.f32 %v1644
        %vm1652 = vmor %vm1650, %vm1651
        %v1653 = vsel %vm1652, %v1644, %v1649
        %v1654 = vrsqrt.pop %v1392
        %v1655 = vmul.f32 %v1654, %v1392
        %v1656 = vmul.f32 %v1655, %v1654
        %v1657 = vmul.f32 0.5, %v1656
        %v1658 = vsub.f32 1.5, %v1657
        %v1659 = vmul.f32 %v1654, %v1658
        %vm1660 = vweird.f32 %v1392
        %vm1661 = vweird.f32 %v1654
        %vm1662 = vmor %vm1660, %vm1661
        %v1663 = vsel %vm1662, %v1654, %v1659
        %v1664 = vrsqrt.pop %v1393
        %v1665 = vmul.f32 %v1664, %v1393
        %v1666 = vmul.f32 %v1665, %v1664
        %v1667 = vmul.f32 0.5, %v1666
        %v1668 = vsub.f32 1.5, %v1667
        %v1669 = vmul.f32 %v1664, %v1668
        %vm1670 = vweird.f32 %v1393
        %vm1671 = vweird.f32 %v1664
        %vm1672 = vmor %vm1670, %vm1671
        %v1673 = vsel %vm1672, %v1664, %v1669
        %v1674 = vrsqrt.pop %v1394
        %v1675 = vmul.f32 %v1674, %v1394
        %v1676 = vmul.f32 %v1675, %v1674
        %v1677 = vmul.f32 0.5, %v1676
        %v1678 = vsub.f32 1.5, %v1677
        %v1679 = vmul.f32 %v1674, %v1678
        %vm1680 = vweird.f32 %v1394
        %vm1681 = vweird.f32 %v1674
        %vm1682 = vmor %vm1680, %vm1681
        %v1683 = vsel %vm1682, %v1674, %v1679
        %v1684 = vrsqrt.pop %v1395
        %v1685 = vmul.f32 %v1684, %v1395
        %v1686 = vmul.f32 %v1685, %v1684
        %v1687 = vmul.f32 0.5, %v1686
        %v1688 = vsub.f32 1.5, %v1687
        %v1689 = vmul.f32 %v1684, %v1688
        %vm1690 = vweird.f32 %v1395
        %vm1691 = vweird.f32 %v1684
        %vm1692 = vmor %vm1690, %vm1691
        %v1693 = vsel %vm1692, %v1684, %v1689
        %v1694 = vrsqrt.pop %v1396
        %v1695 = vmul.f32 %v1694, %v1396
        %v1696 = vmul.f32 %v1695, %v1694
        %v1697 = vmul.f32 0.5, %v1696
        %v1698 = vsub.f32 1.5, %v1697
        %v1699 = vmul.f32 %v1694, %v1698
        %vm1700 = vweird.f32 %v1396
        %vm1701 = vweird.f32 %v1694
        %vm1702 = vmor %vm1700, %vm1701
        %v1703 = vsel %vm1702, %v1694, %v1699
        %v1704 = vrsqrt.pop %v1397
        %v1705 = vmul.f32 %v1704, %v1397
        %v1706 = vmul.f32 %v1705, %v1704
        %v1707 = vmul.f32 0.5, %v1706
        %v1708 = vsub.f32 1.5, %v1707
        %v1709 = vmul.f32 %v1704, %v1708
        %vm1710 = vweird.f32 %v1397
        %vm1711 = vweird.f32 %v1704
        %vm1712 = vmor %vm1710, %vm1711
        %v1713 = vsel %vm1712, %v1704, %v1709
        %v1714 = vrsqrt.pop %v1398
        %v1715 = vmul.f32 %v1714, %v1398
        %v1716 = vmul.f32 %v1715, %v1714
        %v1717 = vmul.f32 0.5, %v1716
        %v1718 = vsub.f32 1.5, %v1717
        %v1719 = vmul.f32 %v1714, %v1718
        %vm1720 = vweird.f32 %v1398
        %vm1721 = vweird.f32 %v1714
        %vm1722 = vmor %vm1720, %vm1721
        %v1723 = vsel %vm1722, %v1714, %v1719
        %v1724 = vrsqrt.pop %v1399
        %v1725 = vmul.f32 %v1724, %v1399
        %v1726 = vmul.f32 %v1725, %v1724
        %v1727 = vmul.f32 0.5, %v1726
        %v1728 = vsub.f32 1.5, %v1727
        %v1729 = vmul.f32 %v1724, %v1728
        %vm1730 = vweird.f32 %v1399
        %vm1731 = vweird.f32 %v1724
        %vm1732 = vmor %vm1730, %vm1731
        %v1733 = vsel %vm1732, %v1724, %v1729
        %v1734 = vrsqrt.pop %v1400
        %v1735 = vmul.f32 %v1734, %v1400
        %v1736 = vmul.f32 %v1735, %v1734
        %v1737 = vmul.f32 0.5, %v1736
        %v1738 = vsub.f32 1.5, %v1737
        %v1739 = vmul.f32 %v1734, %v1738
        %vm1740 = vweird.f32 %v1400
        %vm1741 = vweird.f32 %v1734
        %vm1742 = vmor %vm1740, %vm1741
        %v1743 = vsel %vm1742, %v1734, %v1739
        %v1744 = vrsqrt.pop %v1401
        %v1745 = vmul.f32 %v1744, %v1401
        %v1746 = vmul.f32 %v1745, %v1744
        %v1747 = vmul.f32 0.5, %v1746
        %v1748 = vsub.f32 1.5, %v1747
        %v1749 = vmul.f32 %v1744, %v1748
        %vm1750 = vweird.f32 %v1401
        %vm1751 = vweird.f32 %v1744
        %vm1752 = vmor %vm1750, %vm1751
        %v1753 = vsel %vm1752, %v1744, %v1749
        %v1754 = vrsqrt.pop %v1402
        %v1755 = vmul.f32 %v1754, %v1402
        %v1756 = vmul.f32 %v1755, %v1754
        %v1757 = vmul.f32 0.5, %v1756
        %v1758 = vsub.f32 1.5, %v1757
        %v1759 = vmul.f32 %v1754, %v1758
        %vm1760 = vweird.f32 %v1402
        %vm1761 = vweird.f32 %v1754
        %vm1762 = vmor %vm1760, %vm1761
        %v1763 = vsel %vm1762, %v1754, %v1759
        %v1764 = vrsqrt.pop %v1403
        %v1765 = vmul.f32 %v1764, %v1403
        %v1766 = vmul.f32 %v1765, %v1764
        %v1767 = vmul.f32 0.5, %v1766
        %v1768 = vsub.f32 1.5, %v1767
        %v1769 = vmul.f32 %v1764, %v1768
        %vm1770 = vweird.f32 %v1403
        %vm1771 = vweird.f32 %v1764
        %vm1772 = vmor %vm1770, %vm1771
        %v1773 = vsel %vm1772, %v1764, %v1769
        %v1774 = vrsqrt.pop %v1404
        %v1775 = vmul.f32 %v1774, %v1404
        %v1776 = vmul.f32 %v1775, %v1774
        %v1777 = vmul.f32 0.5, %v1776
        %v1778 = vsub.f32 1.5, %v1777
        %v1779 = vmul.f32 %v1774, %v1778
        %vm1780 = vweird.f32 %v1404
        %vm1781 = vweird.f32 %v1774
        %vm1782 = vmor %vm1780, %vm1781
        %v1783 = vsel %vm1782, %v1774, %v1779
        %v1784 = vrsqrt.pop %v1405
        %v1785 = vmul.f32 %v1784, %v1405
        %v1786 = vmul.f32 %v1785, %v1784
        %v1787 = vmul.f32 0.5, %v1786
        %v1788 = vsub.f32 1.5, %v1787
        %v1789 = vmul.f32 %v1784, %v1788
        %vm1790 = vweird.f32 %v1405
        %vm1791 = vweird.f32 %v1784
        %vm1792 = vmor %vm1790, %vm1791
        %v1793 = vsel %vm1792, %v1784, %v1789
        %v1794 = vrsqrt.pop %v1406
        %v1795 = vmul.f32 %v1794, %v1406
        %v1796 = vmul.f32 %v1795, %v1794
        %v1797 = vmul.f32 0.5, %v1796
        %v1798 = vsub.f32 1.5, %v1797
        %v1799 = vmul.f32 %v1794, %v1798
        %vm1800 = vweird.f32 %v1406
        %vm1801 = vweird.f32 %v1794
        %vm1802 = vmor %vm1800, %vm1801
        %v1803 = vsel %vm1802, %v1794, %v1799
        %v1804 = vrsqrt.pop %v1407
        %v1805 = vmul.f32 %v1804, %v1407
        %v1806 = vmul.f32 %v1805, %v1804
        %v1807 = vmul.f32 0.5, %v1806
        %v1808 = vsub.f32 1.5, %v1807
        %v1809 = vmul.f32 %v1804, %v1808
        %vm1810 = vweird.f32 %v1407
        %vm1811 = vweird.f32 %v1804
        %vm1812 = vmor %vm1810, %vm1811
        %v1813 = vsel %vm1812, %v1804, %v1809
        %v1814 = vrsqrt.pop %v1408
        %v1815 = vmul.f32 %v1814, %v1408
        %v1816 = vmul.f32 %v1815, %v1814
        %v1817 = vmul.f32 0.5, %v1816
        %v1818 = vsub.f32 1.5, %v1817
        %v1819 = vmul.f32 %v1814, %v1818
        %vm1820 = vweird.f32 %v1408
        %vm1821 = vweird.f32 %v1814
        %vm1822 = vmor %vm1820, %vm1821
        %v1823 = vsel %vm1822, %v1814, %v1819
        %v1824 = vrsqrt.pop %v1409
        %v1825 = vmul.f32 %v1824, %v1409
        %v1826 = vmul.f32 %v1825, %v1824
        %v1827 = vmul.f32 0.5, %v1826
        %v1828 = vsub.f32 1.5, %v1827
        %v1829 = vmul.f32 %v1824, %v1828
        %vm1830 = vweird.f32 %v1409
        %vm1831 = vweird.f32 %v1824
        %vm1832 = vmor %vm1830, %vm1831
        %v1833 = vsel %vm1832, %v1824, %v1829
        %v1834 = vrsqrt.pop %v1410
        %v1835 = vmul.f32 %v1834, %v1410
        %v1836 = vmul.f32 %v1835, %v1834
        %v1837 = vmul.f32 0.5, %v1836
        %v1838 = vsub.f32 1.5, %v1837
        %v1839 = vmul.f32 %v1834, %v1838
        %vm1840 = vweird.f32 %v1410
        %vm1841 = vweird.f32 %v1834
        %vm1842 = vmor %vm1840, %vm1841
        %v1843 = vsel %vm1842, %v1834, %v1839
        %v1844 = vrsqrt.pop %v1411
        %v1845 = vmul.f32 %v1844, %v1411
        %v1846 = vmul.f32 %v1845, %v1844
        %v1847 = vmul.f32 0.5, %v1846
        %v1848 = vsub.f32 1.5, %v1847
        %v1849 = vmul.f32 %v1844, %v1848
        %vm1850 = vweird.f32 %v1411
        %vm1851 = vweird.f32 %v1844
        %vm1852 = vmor %vm1850, %vm1851
        %v1853 = vsel %vm1852, %v1844, %v1849
        %v1854 = vrsqrt.pop %v1412
        %v1855 = vmul.f32 %v1854, %v1412
        %v1856 = vmul.f32 %v1855, %v1854
        %v1857 = vmul.f32 0.5, %v1856
        %v1858 = vsub.f32 1.5, %v1857
        %v1859 = vmul.f32 %v1854, %v1858
        %vm1860 = vweird.f32 %v1412
        %vm1861 = vweird.f32 %v1854
        %vm1862 = vmor %vm1860, %vm1861
        %v1863 = vsel %vm1862, %v1854, %v1859
        %v1864 = vrsqrt.pop %v1413
        %v1865 = vmul.f32 %v1864, %v1413
        %v1866 = vmul.f32 %v1865, %v1864
        %v1867 = vmul.f32 0.5, %v1866
        %v1868 = vsub.f32 1.5, %v1867
        %v1869 = vmul.f32 %v1864, %v1868
        %vm1870 = vweird.f32 %v1413
        %vm1871 = vweird.f32 %v1864
        %vm1872 = vmor %vm1870, %vm1871
        %v1873 = vsel %vm1872, %v1864, %v1869
        %v1874 = vrsqrt.pop %v1414
        %v1875 = vmul.f32 %v1874, %v1414
        %v1876 = vmul.f32 %v1875, %v1874
        %v1877 = vmul.f32 0.5, %v1876
        %v1878 = vsub.f32 1.5, %v1877
        %v1879 = vmul.f32 %v1874, %v1878
        %vm1880 = vweird.f32 %v1414
        %vm1881 = vweird.f32 %v1874
        %vm1882 = vmor %vm1880, %vm1881
        %v1883 = vsel %vm1882, %v1874, %v1879
        %v1884 = vrsqrt.pop %v1415
        %v1885 = vmul.f32 %v1884, %v1415
        %v1886 = vmul.f32 %v1885, %v1884
        %v1887 = vmul.f32 0.5, %v1886
        %v1888 = vsub.f32 1.5, %v1887
        %v1889 = vmul.f32 %v1884, %v1888
        %vm1890 = vweird.f32 %v1415
        %vm1891 = vweird.f32 %v1884
        %vm1892 = vmor %vm1890, %vm1891
        %v1893 = vsel %vm1892, %v1884, %v1889
        %v1894 = vrsqrt.pop %v1416
        %v1895 = vmul.f32 %v1894, %v1416
        %v1896 = vmul.f32 %v1895, %v1894
        %v1897 = vmul.f32 0.5, %v1896
        %v1898 = vsub.f32 1.5, %v1897
        %v1899 = vmul.f32 %v1894, %v1898
        %vm1900 = vweird.f32 %v1416
        %vm1901 = vweird.f32 %v1894
        %vm1902 = vmor %vm1900, %vm1901
        %v1903 = vsel %vm1902, %v1894, %v1899
        %v1904 = vrsqrt.pop %v1417
        %v1905 = vmul.f32 %v1904, %v1417
        %v1906 = vmul.f32 %v1905, %v1904
        %v1907 = vmul.f32 0.5, %v1906
        %v1908 = vsub.f32 1.5, %v1907
        %v1909 = vmul.f32 %v1904, %v1908
        %vm1910 = vweird.f32 %v1417
        %vm1911 = vweird.f32 %v1904
        %vm1912 = vmor %vm1910, %vm1911
        %v1913 = vsel %vm1912, %v1904, %v1909
        %v1914 = vrsqrt.pop %v1418
        %v1915 = vmul.f32 %v1914, %v1418
        %v1916 = vmul.f32 %v1915, %v1914
        %v1917 = vmul.f32 0.5, %v1916
        %v1918 = vsub.f32 1.5, %v1917
        %v1919 = vmul.f32 %v1914, %v1918
        %vm1920 = vweird.f32 %v1418
        %vm1921 = vweird.f32 %v1914
        %vm1922 = vmor %vm1920, %vm1921
        %v1923 = vsel %vm1922, %v1914, %v1919
        %v1924 = vrsqrt.pop %v1419
        %v1925 = vmul.f32 %v1924, %v1419
        %v1926 = vmul.f32 %v1925, %v1924
        %v1927 = vmul.f32 0.5, %v1926
        %v1928 = vsub.f32 1.5, %v1927
        %v1929 = vmul.f32 %v1924, %v1928
        %vm1930 = vweird.f32 %v1419
        %vm1931 = vweird.f32 %v1924
        %vm1932 = vmor %vm1930, %vm1931
        %v1933 = vsel %vm1932, %v1924, %v1929
        %v1934 = vrsqrt.pop %v1420
        %v1935 = vmul.f32 %v1934, %v1420
        %v1936 = vmul.f32 %v1935, %v1934
        %v1937 = vmul.f32 0.5, %v1936
        %v1938 = vsub.f32 1.5, %v1937
        %v1939 = vmul.f32 %v1934, %v1938
        %vm1940 = vweird.f32 %v1420
        %vm1941 = vweird.f32 %v1934
        %vm1942 = vmor %vm1940, %vm1941
        %v1943 = vsel %vm1942, %v1934, %v1939
        %v1944 = vrsqrt.pop %v1421
        %v1945 = vmul.f32 %v1944, %v1421
        %v1946 = vmul.f32 %v1945, %v1944
        %v1947 = vmul.f32 0.5, %v1946
        %v1948 = vsub.f32 1.5, %v1947
        %v1949 = vmul.f32 %v1944, %v1948
        %vm1950 = vweird.f32 %v1421
        %vm1951 = vweird.f32 %v1944
        %vm1952 = vmor %vm1950, %vm1951
        %v1953 = vsel %vm1952, %v1944, %v1949
        %v1954 = vrsqrt.pop %v1422
        %v1955 = vmul.f32 %v1954, %v1422
        %v1956 = vmul.f32 %v1955, %v1954
        %v1957 = vmul.f32 0.5, %v1956
        %v1958 = vsub.f32 1.5, %v1957
        %v1959 = vmul.f32 %v1954, %v1958
        %vm1960 = vweird.f32 %v1422
        %vm1961 = vweird.f32 %v1954
        %vm1962 = vmor %vm1960, %vm1961
        %v1963 = vsel %vm1962, %v1954, %v1959
        %v1964 = vrsqrt.pop %v1423
        %v1965 = vmul.f32 %v1964, %v1423
        %v1966 = vmul.f32 %v1965, %v1964
        %v1967 = vmul.f32 0.5, %v1966
        %v1968 = vsub.f32 1.5, %v1967
        %v1969 = vmul.f32 %v1964, %v1968
        %vm1970 = vweird.f32 %v1423
        %vm1971 = vweird.f32 %v1964
        %vm1972 = vmor %vm1970, %vm1971
        %v1973 = vsel %vm1972, %v1964, %v1969
        %v1974 = vrsqrt.pop %v1424
        %v1975 = vmul.f32 %v1974, %v1424
        %v1976 = vmul.f32 %v1975, %v1974
        %v1977 = vmul.f32 0.5, %v1976
        %v1978 = vsub.f32 1.5, %v1977
        %v1979 = vmul.f32 %v1974, %v1978
        %vm1980 = vweird.f32 %v1424
        %vm1981 = vweird.f32 %v1974
        %vm1982 = vmor %vm1980, %vm1981
        %v1983 = vsel %vm1982, %v1974, %v1979
        %v1984 = vrsqrt.pop %v1425
        %v1985 = vmul.f32 %v1984, %v1425
        %v1986 = vmul.f32 %v1985, %v1984
        %v1987 = vmul.f32 0.5, %v1986
        %v1988 = vsub.f32 1.5, %v1987
        %v1989 = vmul.f32 %v1984, %v1988
        %vm1990 = vweird.f32 %v1425
        %vm1991 = vweird.f32 %v1984
        %vm1992 = vmor %vm1990, %vm1991
        %v1993 = vsel %vm1992, %v1984, %v1989
        %v1994 = vrsqrt.pop %v1426
        %v1995 = vmul.f32 %v1994, %v1426
        %v1996 = vmul.f32 %v1995, %v1994
        %v1997 = vmul.f32 0.5, %v1996
        %v1998 = vsub.f32 1.5, %v1997
        %v1999 = vmul.f32 %v1994, %v1998
        %vm2000 = vweird.f32 %v1426
        %vm2001 = vweird.f32 %v1994
        %vm2002 = vmor %vm2000, %vm2001
        %v2003 = vsel %vm2002, %v1994, %v1999
        %v2004 = vrsqrt.pop %v1427
        %v2005 = vmul.f32 %v2004, %v1427
        %v2006 = vmul.f32 %v2005, %v2004
        %v2007 = vmul.f32 0.5, %v2006
        %v2008 = vsub.f32 1.5, %v2007
        %v2009 = vmul.f32 %v2004, %v2008
        %vm2010 = vweird.f32 %v1427
        %vm2011 = vweird.f32 %v2004
        %vm2012 = vmor %vm2010, %vm2011
        %v2013 = vsel %vm2012, %v2004, %v2009
        %v2014 = vrsqrt.pop %v1428
        %v2015 = vmul.f32 %v2014, %v1428
        %v2016 = vmul.f32 %v2015, %v2014
        %v2017 = vmul.f32 0.5, %v2016
        %v2018 = vsub.f32 1.5, %v2017
        %v2019 = vmul.f32 %v2014, %v2018
        %vm2020 = vweird.f32 %v1428
        %vm2021 = vweird.f32 %v2014
        %vm2022 = vmor %vm2020, %vm2021
        %v2023 = vsel %vm2022, %v2014, %v2019
        %v2024 = vrsqrt.pop %v1429
        %v2025 = vmul.f32 %v2024, %v1429
        %v2026 = vmul.f32 %v2025, %v2024
        %v2027 = vmul.f32 0.5, %v2026
        %v2028 = vsub.f32 1.5, %v2027
        %v2029 = vmul.f32 %v2024, %v2028
        %vm2030 = vweird.f32 %v1429
        %vm2031 = vweird.f32 %v2024
        %vm2032 = vmor %vm2030, %vm2031
        %v2033 = vsel %vm2032, %v2024, %v2029
        %v2034 = vrsqrt.pop %v1430
        %v2035 = vmul.f32 %v2034, %v1430
        %v2036 = vmul.f32 %v2035, %v2034
        %v2037 = vmul.f32 0.5, %v2036
        %v2038 = vsub.f32 1.5, %v2037
        %v2039 = vmul.f32 %v2034, %v2038
        %vm2040 = vweird.f32 %v1430
        %vm2041 = vweird.f32 %v2034
        %vm2042 = vmor %vm2040, %vm2041
        %v2043 = vsel %vm2042, %v2034, %v2039
        %v2044 = vrsqrt.pop %v1431
        %v2045 = vmul.f32 %v2044, %v1431
        %v2046 = vmul.f32 %v2045, %v2044
        %v2047 = vmul.f32 0.5, %v2046
        %v2048 = vsub.f32 1.5, %v2047
        %v2049 = vmul.f32 %v2044, %v2048
        %vm2050 = vweird.f32 %v1431
        %vm2051 = vweird.f32 %v2044
        %vm2052 = vmor %vm2050, %vm2051
        %v2053 = vsel %vm2052, %v2044, %v2049
        %v2054 = vrsqrt.pop %v1432
        %v2055 = vmul.f32 %v2054, %v1432
        %v2056 = vmul.f32 %v2055, %v2054
        %v2057 = vmul.f32 0.5, %v2056
        %v2058 = vsub.f32 1.5, %v2057
        %v2059 = vmul.f32 %v2054, %v2058
        %vm2060 = vweird.f32 %v1432
        %vm2061 = vweird.f32 %v2054
        %vm2062 = vmor %vm2060, %vm2061
        %v2063 = vsel %vm2062, %v2054, %v2059
        %v2064 = vrsqrt.pop %v1433
        %v2065 = vmul.f32 %v2064, %v1433
        %v2066 = vmul.f32 %v2065, %v2064
        %v2067 = vmul.f32 0.5, %v2066
        %v2068 = vsub.f32 1.5, %v2067
        %v2069 = vmul.f32 %v2064, %v2068
        %vm2070 = vweird.f32 %v1433
        %vm2071 = vweird.f32 %v2064
        %vm2072 = vmor %vm2070, %vm2071
        %v2073 = vsel %vm2072, %v2064, %v2069
        %v2074 = vmul.f32 %v986, %v1443
        %v2075 = vmul.f32 %v987, %v1453
        %v2076 = vmul.f32 %v988, %v1463
        %v2077 = vmul.f32 %v989, %v1473
        %v2078 = vmul.f32 %v990, %v1483
        %v2079 = vmul.f32 %v991, %v1493
        %v2080 = vmul.f32 %v992, %v1503
        %v2081 = vmul.f32 %v993, %v1513
        %v2082 = vmul.f32 %v994, %v1523
        %v2083 = vmul.f32 %v995, %v1533
        %v2084 = vmul.f32 %v996, %v1543
        %v2085 = vmul.f32 %v997, %v1553
        %v2086 = vmul.f32 %v998, %v1563
        %v2087 = vmul.f32 %v999, %v1573
        %v2088 = vmul.f32 %v1000, %v1583
        %v2089 = vmul.f32 %v1001, %v1593
        %v2090 = vmul.f32 %v1002, %v1603
        %v2091 = vmul.f32 %v1003, %v1613
        %v2092 = vmul.f32 %v1004, %v1623
        %v2093 = vmul.f32 %v1005, %v1633
        %v2094 = vmul.f32 %v1006, %v1643
        %v2095 = vmul.f32 %v1007, %v1653
        %v2096 = vmul.f32 %v1008, %v1663
        %v2097 = vmul.f32 %v1009, %v1673
        %v2098 = vmul.f32 %v1010, %v1683
        %v2099 = vmul.f32 %v1011, %v1693
        %v2100 = vmul.f32 %v1012, %v1703
        %v2101 = vmul.f32 %v1013, %v1713
        %v2102 = vmul.f32 %v1014, %v1723
        %v2103 = vmul.f32 %v1015, %v1733
        %v2104 = vmul.f32 %v1016, %v1743
        %v2105 = vmul.f32 %v1017, %v1753
        %v2106 = vmul.f32 %v1018, %v1763
        %v2107 = vmul.f32 %v1019, %v1773
        %v2108 = vmul.f32 %v1020, %v1783
        %v2109 = vmul.f32 %v1021, %v1793
        %v2110 = vmul.f32 %v1022, %v1803
        %v2111 = vmul.f32 %v1023, %v1813
        %v2112 = vmul.f32 %v1024, %v1823
        %v2113 = vmul.f32 %v1025, %v1833
        %v2114 = vmul.f32 %v1026, %v1843
        %v2115 = vmul.f32 %v1027, %v1853
        %v2116 = vmul.f32 %v1028, %v1863
        %v2117 = vmul.f32 %v1029, %v1873
        %v2118 = vmul.f32 %v1030, %v1883
        %v2119 = vmul.f32 %v1031, %v1893
        %v2120 = vmul.f32 %v1032, %v1903
        %v2121 = vmul.f32 %v1033, %v1913
        %v2122 = vmul.f32 %v1034, %v1923
        %v2123 = vmul.f32 %v1035, %v1933
        %v2124 = vmul.f32 %v1036, %v1943
        %v2125 = vmul.f32 %v1037, %v1953
        %v2126 = vmul.f32 %v1038, %v1963
        %v2127 = vmul.f32 %v1039, %v1973
        %v2128 = vmul.f32 %v1040, %v1983
        %v2129 = vmul.f32 %v1041, %v1993
        %v2130 = vmul.f32 %v1042, %v2003
        %v2131 = vmul.f32 %v1043, %v2013
        %v2132 = vmul.f32 %v1044, %v2023
        %v2133 = vmul.f32 %v1045, %v2033
        %v2134 = vmul.f32 %v1046, %v2043
        %v2135 = vmul.f32 %v1047, %v2053
        %v2136 = vmul.f32 %v1048, %v2063
        %v2137 = vmul.f32 %v1049, %v2073
        %v2138 = vld [vmem:[%s3] sm:$0x1]
        %v2140 = vperm.slane %v2138, 0
        %v2142 = vmul.f32 %v2074, %v2140
        %v2143 = vmul.f32 %v2075, %v2140
        %v2144 = vmul.f32 %v2076, %v2140
        %v2145 = vmul.f32 %v2077, %v2140
        %v2146 = vmul.f32 %v2078, %v2140
        %v2147 = vmul.f32 %v2079, %v2140
        %v2148 = vmul.f32 %v2080, %v2140
        %v2149 = vmul.f32 %v2081, %v2140
        %v2150 = vmul.f32 %v2082, %v2140
        %v2151 = vmul.f32 %v2083, %v2140
        %v2152 = vmul.f32 %v2084, %v2140
        %v2153 = vmul.f32 %v2085, %v2140
        %v2154 = vmul.f32 %v2086, %v2140
        %v2155 = vmul.f32 %v2087, %v2140
        %v2156 = vmul.f32 %v2088, %v2140
        %v2157 = vmul.f32 %v2089, %v2140
        %v2158 = vmul.f32 %v2090, %v2140
        %v2159 = vmul.f32 %v2091, %v2140
        %v2160 = vmul.f32 %v2092, %v2140
        %v2161 = vmul.f32 %v2093, %v2140
        %v2162 = vmul.f32 %v2094, %v2140
        %v2163 = vmul.f32 %v2095, %v2140
        %v2164 = vmul.f32 %v2096, %v2140
        %v2165 = vmul.f32 %v2097, %v2140
        %v2166 = vmul.f32 %v2098, %v2140
        %v2167 = vmul.f32 %v2099, %v2140
        %v2168 = vmul.f32 %v2100, %v2140
        %v2169 = vmul.f32 %v2101, %v2140
        %v2170 = vmul.f32 %v2102, %v2140
        %v2171 = vmul.f32 %v2103, %v2140
        %v2172 = vmul.f32 %v2104, %v2140
        %v2173 = vmul.f32 %v2105, %v2140
        %v2174 = vmul.f32 %v2106, %v2140
        %v2175 = vmul.f32 %v2107, %v2140
        %v2176 = vmul.f32 %v2108, %v2140
        %v2177 = vmul.f32 %v2109, %v2140
        %v2178 = vmul.f32 %v2110, %v2140
        %v2179 = vmul.f32 %v2111, %v2140
        %v2180 = vmul.f32 %v2112, %v2140
        %v2181 = vmul.f32 %v2113, %v2140
        %v2182 = vmul.f32 %v2114, %v2140
        %v2183 = vmul.f32 %v2115, %v2140
        %v2184 = vmul.f32 %v2116, %v2140
        %v2185 = vmul.f32 %v2117, %v2140
        %v2186 = vmul.f32 %v2118, %v2140
        %v2187 = vmul.f32 %v2119, %v2140
        %v2188 = vmul.f32 %v2120, %v2140
        %v2189 = vmul.f32 %v2121, %v2140
        %v2190 = vmul.f32 %v2122, %v2140
        %v2191 = vmul.f32 %v2123, %v2140
        %v2192 = vmul.f32 %v2124, %v2140
        %v2193 = vmul.f32 %v2125, %v2140
        %v2194 = vmul.f32 %v2126, %v2140
        %v2195 = vmul.f32 %v2127, %v2140
        %v2196 = vmul.f32 %v2128, %v2140
        %v2197 = vmul.f32 %v2129, %v2140
        %v2198 = vmul.f32 %v2130, %v2140
        %v2199 = vmul.f32 %v2131, %v2140
        %v2200 = vmul.f32 %v2132, %v2140
        %v2201 = vmul.f32 %v2133, %v2140
        %v2202 = vmul.f32 %v2134, %v2140
        %v2203 = vmul.f32 %v2135, %v2140
        %v2204 = vmul.f32 %v2136, %v2140
        %v2205 = vmul.f32 %v2137, %v2140
        %v2206 = vld [vmem:[%s4] sm:$0x1]
        %v2208 = vperm.slane %v2206, 0
        %v2210 = vadd.f32 %v2142, %v2208
        %v2211 = vadd.f32 %v2143, %v2208
        %v2212 = vadd.f32 %v2144, %v2208
        %v2213 = vadd.f32 %v2145, %v2208
        %v2214 = vadd.f32 %v2146, %v2208
        %v2215 = vadd.f32 %v2147, %v2208
        %v2216 = vadd.f32 %v2148, %v2208
        %v2217 = vadd.f32 %v2149, %v2208
        %v2218 = vadd.f32 %v2150, %v2208
        %v2219 = vadd.f32 %v2151, %v2208
        %v2220 = vadd.f32 %v2152, %v2208
        %v2221 = vadd.f32 %v2153, %v2208
        %v2222 = vadd.f32 %v2154, %v2208
        %v2223 = vadd.f32 %v2155, %v2208
        %v2224 = vadd.f32 %v2156, %v2208
        %v2225 = vadd.f32 %v2157, %v2208
        %v2226 = vadd.f32 %v2158, %v2208
        %v2227 = vadd.f32 %v2159, %v2208
        %v2228 = vadd.f32 %v2160, %v2208
        %v2229 = vadd.f32 %v2161, %v2208
        %v2230 = vadd.f32 %v2162, %v2208
        %v2231 = vadd.f32 %v2163, %v2208
        %v2232 = vadd.f32 %v2164, %v2208
        %v2233 = vadd.f32 %v2165, %v2208
        %v2234 = vadd.f32 %v2166, %v2208
        %v2235 = vadd.f32 %v2167, %v2208
        %v2236 = vadd.f32 %v2168, %v2208
        %v2237 = vadd.f32 %v2169, %v2208
        %v2238 = vadd.f32 %v2170, %v2208
        %v2239 = vadd.f32 %v2171, %v2208
        %v2240 = vadd.f32 %v2172, %v2208
        %v2241 = vadd.f32 %v2173, %v2208
        %v2242 = vadd.f32 %v2174, %v2208
        %v2243 = vadd.f32 %v2175, %v2208
        %v2244 = vadd.f32 %v2176, %v2208
        %v2245 = vadd.f32 %v2177, %v2208
        %v2246 = vadd.f32 %v2178, %v2208
        %v2247 = vadd.f32 %v2179, %v2208
        %v2248 = vadd.f32 %v2180, %v2208
        %v2249 = vadd.f32 %v2181, %v2208
        %v2250 = vadd.f32 %v2182, %v2208
        %v2251 = vadd.f32 %v2183, %v2208
        %v2252 = vadd.f32 %v2184, %v2208
        %v2253 = vadd.f32 %v2185, %v2208
        %v2254 = vadd.f32 %v2186, %v2208
        %v2255 = vadd.f32 %v2187, %v2208
        %v2256 = vadd.f32 %v2188, %v2208
        %v2257 = vadd.f32 %v2189, %v2208
        %v2258 = vadd.f32 %v2190, %v2208
        %v2259 = vadd.f32 %v2191, %v2208
        %v2260 = vadd.f32 %v2192, %v2208
        %v2261 = vadd.f32 %v2193, %v2208
        %v2262 = vadd.f32 %v2194, %v2208
        %v2263 = vadd.f32 %v2195, %v2208
        %v2264 = vadd.f32 %v2196, %v2208
        %v2265 = vadd.f32 %v2197, %v2208
        %v2266 = vadd.f32 %v2198, %v2208
        %v2267 = vadd.f32 %v2199, %v2208
        %v2268 = vadd.f32 %v2200, %v2208
        %v2269 = vadd.f32 %v2201, %v2208
        %v2270 = vadd.f32 %v2202, %v2208
        %v2271 = vadd.f32 %v2203, %v2208
        %v2272 = vadd.f32 %v2204, %v2208
        %v2273 = vadd.f32 %v2205, %v2208
        %v2274 = vmax.f32 %v2210, 0.0
        %v2275 = vmax.f32 %v2211, 0.0
        %v2276 = vmax.f32 %v2212, 0.0
        %v2277 = vmax.f32 %v2213, 0.0
        %v2278 = vmax.f32 %v2214, 0.0
        %v2279 = vmax.f32 %v2215, 0.0
        %v2280 = vmax.f32 %v2216, 0.0
        %v2281 = vmax.f32 %v2217, 0.0
        %v2282 = vmax.f32 %v2218, 0.0
        %v2283 = vmax.f32 %v2219, 0.0
        %v2284 = vmax.f32 %v2220, 0.0
        %v2285 = vmax.f32 %v2221, 0.0
        %v2286 = vmax.f32 %v2222, 0.0
        %v2287 = vmax.f32 %v2223, 0.0
        %v2288 = vmax.f32 %v2224, 0.0
        %v2289 = vmax.f32 %v2225, 0.0
        %v2290 = vmax.f32 %v2226, 0.0
        %v2291 = vmax.f32 %v2227, 0.0
        %v2292 = vmax.f32 %v2228, 0.0
        %v2293 = vmax.f32 %v2229, 0.0
        %v2294 = vmax.f32 %v2230, 0.0
        %v2295 = vmax.f32 %v2231, 0.0
        %v2296 = vmax.f32 %v2232, 0.0
        %v2297 = vmax.f32 %v2233, 0.0
        %v2298 = vmax.f32 %v2234, 0.0
        %v2299 = vmax.f32 %v2235, 0.0
        %v2300 = vmax.f32 %v2236, 0.0
        %v2301 = vmax.f32 %v2237, 0.0
        %v2302 = vmax.f32 %v2238, 0.0
        %v2303 = vmax.f32 %v2239, 0.0
        %v2304 = vmax.f32 %v2240, 0.0
        %v2305 = vmax.f32 %v2241, 0.0
        %v2306 = vmax.f32 %v2242, 0.0
        %v2307 = vmax.f32 %v2243, 0.0
        %v2308 = vmax.f32 %v2244, 0.0
        %v2309 = vmax.f32 %v2245, 0.0
        %v2310 = vmax.f32 %v2246, 0.0
        %v2311 = vmax.f32 %v2247, 0.0
        %v2312 = vmax.f32 %v2248, 0.0
        %v2313 = vmax.f32 %v2249, 0.0
        %v2314 = vmax.f32 %v2250, 0.0
        %v2315 = vmax.f32 %v2251, 0.0
        %v2316 = vmax.f32 %v2252, 0.0
        %v2317 = vmax.f32 %v2253, 0.0
        %v2318 = vmax.f32 %v2254, 0.0
        %v2319 = vmax.f32 %v2255, 0.0
        %v2320 = vmax.f32 %v2256, 0.0
        %v2321 = vmax.f32 %v2257, 0.0
        %v2322 = vmax.f32 %v2258, 0.0
        %v2323 = vmax.f32 %v2259, 0.0
        %v2324 = vmax.f32 %v2260, 0.0
        %v2325 = vmax.f32 %v2261, 0.0
        %v2326 = vmax.f32 %v2262, 0.0
        %v2327 = vmax.f32 %v2263, 0.0
        %v2328 = vmax.f32 %v2264, 0.0
        %v2329 = vmax.f32 %v2265, 0.0
        %v2330 = vmax.f32 %v2266, 0.0
        %v2331 = vmax.f32 %v2267, 0.0
        %v2332 = vmax.f32 %v2268, 0.0
        %v2333 = vmax.f32 %v2269, 0.0
        %v2334 = vmax.f32 %v2270, 0.0
        %v2335 = vmax.f32 %v2271, 0.0
        %v2336 = vmax.f32 %v2272, 0.0
        %v2337 = vmax.f32 %v2273, 0.0
        %2338 = vst.msk [vmem:[%s226] sm:$0xff] %vm722, %v2274
        %2339 = vst.msk [vmem:[%s226 + $0x8] sm:$0xff] %vm722, %v2275
        %2340 = vst.msk [vmem:[%s226 + $0x10] sm:$0xff] %vm722, %v2276
        %2341 = vst.msk [vmem:[%s226 + $0x18] sm:$0xff] %vm722, %v2277
        %2342 = vst.msk [vmem:[%s226 + $0x20] sm:$0xff] %vm722, %v2278
        %2343 = vst.msk [vmem:[%s226 + $0x28] sm:$0xff] %vm722, %v2279
        %2344 = vst.msk [vmem:[%s226 + $0x30] sm:$0xff] %vm722, %v2280
        %2345 = vst.msk [vmem:[%s226 + $0x38] sm:$0xff] %vm722, %v2281
        %2346 = vst.msk [vmem:[%s226 + $0x40] sm:$0xff] %vm722, %v2282
        %2347 = vst.msk [vmem:[%s226 + $0x48] sm:$0xff] %vm722, %v2283
        %2348 = vst.msk [vmem:[%s226 + $0x50] sm:$0xff] %vm722, %v2284
        %2349 = vst.msk [vmem:[%s226 + $0x58] sm:$0xff] %vm722, %v2285
        %2350 = vst.msk [vmem:[%s226 + $0x60] sm:$0xff] %vm722, %v2286
        %2351 = vst.msk [vmem:[%s226 + $0x68] sm:$0xff] %vm722, %v2287
        %2352 = vst.msk [vmem:[%s226 + $0x70] sm:$0xff] %vm722, %v2288
        %2353 = vst.msk [vmem:[%s226 + $0x78] sm:$0xff] %vm722, %v2289
        %2354 = vst.msk [vmem:[%s226 + $0x80] sm:$0xff] %vm722, %v2290
        %2355 = vst.msk [vmem:[%s226 + $0x88] sm:$0xff] %vm722, %v2291
        %2356 = vst.msk [vmem:[%s226 + $0x90] sm:$0xff] %vm722, %v2292
        %2357 = vst.msk [vmem:[%s226 + $0x98] sm:$0xff] %vm722, %v2293
        %2358 = vst.msk [vmem:[%s226 + $0xa0] sm:$0xff] %vm722, %v2294
        %2359 = vst.msk [vmem:[%s226 + $0xa8] sm:$0xff] %vm722, %v2295
        %2360 = vst.msk [vmem:[%s226 + $0xb0] sm:$0xff] %vm722, %v2296
        %2361 = vst.msk [vmem:[%s226 + $0xb8] sm:$0xff] %vm722, %v2297
        %2362 = vst.msk [vmem:[%s226 + $0xc0] sm:$0xff] %vm722, %v2298
        %2363 = vst.msk [vmem:[%s226 + $0xc8] sm:$0xff] %vm722, %v2299
        %2364 = vst.msk [vmem:[%s226 + $0xd0] sm:$0xff] %vm722, %v2300
        %2365 = vst.msk [vmem:[%s226 + $0xd8] sm:$0xff] %vm722, %v2301
        %2366 = vst.msk [vmem:[%s226 + $0xe0] sm:$0xff] %vm722, %v2302
        %2367 = vst.msk [vmem:[%s226 + $0xe8] sm:$0xff] %vm722, %v2303
        %2368 = vst.msk [vmem:[%s226 + $0xf0] sm:$0xff] %vm722, %v2304
        %2369 = vst.msk [vmem:[%s226 + $0xf8] sm:$0xff] %vm722, %v2305
        %2370 = vst.msk [vmem:[%s226 + $0x100] sm:$0xff] %vm722, %v2306
        %2371 = vst.msk [vmem:[%s226 + $0x108] sm:$0xff] %vm722, %v2307
        %2372 = vst.msk [vmem:[%s226 + $0x110] sm:$0xff] %vm722, %v2308
        %2373 = vst.msk [vmem:[%s226 + $0x118] sm:$0xff] %vm722, %v2309
        %2374 = vst.msk [vmem:[%s226 + $0x120] sm:$0xff] %vm722, %v2310
        %2375 = vst.msk [vmem:[%s226 + $0x128] sm:$0xff] %vm722, %v2311
        %2376 = vst.msk [vmem:[%s226 + $0x130] sm:$0xff] %vm722, %v2312
        %2377 = vst.msk [vmem:[%s226 + $0x138] sm:$0xff] %vm722, %v2313
        %2378 = vst.msk [vmem:[%s226 + $0x140] sm:$0xff] %vm722, %v2314
        %2379 = vst.msk [vmem:[%s226 + $0x148] sm:$0xff] %vm722, %v2315
        %2380 = vst.msk [vmem:[%s226 + $0x150] sm:$0xff] %vm722, %v2316
        %2381 = vst.msk [vmem:[%s226 + $0x158] sm:$0xff] %vm722, %v2317
        %2382 = vst.msk [vmem:[%s226 + $0x160] sm:$0xff] %vm722, %v2318
        %2383 = vst.msk [vmem:[%s226 + $0x168] sm:$0xff] %vm722, %v2319
        %2384 = vst.msk [vmem:[%s226 + $0x170] sm:$0xff] %vm722, %v2320
        %2385 = vst.msk [vmem:[%s226 + $0x178] sm:$0xff] %vm722, %v2321
        %2386 = vst.msk [vmem:[%s226 + $0x180] sm:$0xff] %vm722, %v2322
        %2387 = vst.msk [vmem:[%s226 + $0x188] sm:$0xff] %vm722, %v2323
        %2388 = vst.msk [vmem:[%s226 + $0x190] sm:$0xff] %vm722, %v2324
        %2389 = vst.msk [vmem:[%s226 + $0x198] sm:$0xff] %vm722, %v2325
        %2390 = vst.msk [vmem:[%s226 + $0x1a0] sm:$0xff] %vm722, %v2326
        %2391 = vst.msk [vmem:[%s226 + $0x1a8] sm:$0xff] %vm722, %v2327
        %2392 = vst.msk [vmem:[%s226 + $0x1b0] sm:$0xff] %vm722, %v2328
        %2393 = vst.msk [vmem:[%s226 + $0x1b8] sm:$0xff] %vm722, %v2329
        %2394 = vst.msk [vmem:[%s226 + $0x1c0] sm:$0xff] %vm722, %v2330
        %2395 = vst.msk [vmem:[%s226 + $0x1c8] sm:$0xff] %vm722, %v2331
        %2396 = vst.msk [vmem:[%s226 + $0x1d0] sm:$0xff] %vm722, %v2332
        %2397 = vst.msk [vmem:[%s226 + $0x1d8] sm:$0xff] %vm722, %v2333
        %2398 = vst.msk [vmem:[%s226 + $0x1e0] sm:$0xff] %vm722, %v2334
        %2399 = vst.msk [vmem:[%s226 + $0x1e8] sm:$0xff] %vm722, %v2335
        %2400 = vst.msk [vmem:[%s226 + $0x1f0] sm:$0xff] %vm722, %v2336
        %2401 = vst.msk [vmem:[%s226 + $0x1f8] sm:$0xff] %vm722, %v2337
        %s2402 = sand.u32 %s134, 1
        %s2403 = sand.u32 %s134, 1
        %s2404 = smul.addr %s2403, 512
        %s2405 = scalar_lea.vmem [#allocation2], %s2404
        // Predicated region
        $region41: #{tpu_custom_call.1} parent=39 // pred_check
          %p2406 = pneg %p144
        $region42: #{tpu_custom_call.1} parent=39 // pred_check_branch
          %2408 = sbr.rel (%p2406) target = $region44
        $region43: #{tpu_custom_call.1} parent=39 // pred_region
          %s2409 = smul.u32 64, %s16
          %s2410 = ssub.s32 75, %s2409
          %p2411 = scmp.lt.s32.totalorder %s2410, 64
          %s2412 = scalar_select %p2411, %s2410, 64
          %s2413 = smul.u32 8, %s2412
          %p2414 = scmp.ne.s32.totalorder 0, %s2413
          %s2415 = smul.addr %s2409, 8
          %s2416 = scalar_lea.vmem %s5, %s2415
          // Predicated region
          $region45: #{tpu_custom_call.1} parent=43 // pred_check
            %p2417 = pneg %p2414
          $region46: #{tpu_custom_call.1} parent=43 // pred_check_branch
            %2419 = sbr.rel (%p2417) target = $region48
          $region47: #{tpu_custom_call.1} parent=43 // pred_region
            // Predicated region
            $region49: #{tpu_custom_call.1} parent=47 // pred_check
              _
            $region50: #{tpu_custom_call.1} parent=47 // pred_check_branch
              %2421 = sbr.rel (0) target = $region52
            $region51: #{tpu_custom_call.1} parent=47 // pred_region
              // Predicated region
              $region71: #{tpu_custom_call.1} parent=51 // pred_check
                _
              $region72: #{tpu_custom_call.1} parent=51 // pred_check_branch
                %2533 = sbr.rel (0) target = $region74
              $region73: #{tpu_custom_call.1} parent=51 // pred_region
                %s2534 = sshrl.u32 %s2412, 5
                // While loop
                $region75: #{tpu_custom_call.1} parent=73 // loop_pre_header
                  _
                $region76: #{tpu_custom_call.1} parent=73 // loop_header
                  %s2536 = sphi 0, %s2538
                  %p2537 = scmp.ge.s32.totalorder %s2536, %s2534
                  %s2541 = sphi 0, %s2610
                  %s2542 = sphi %s2405, %s2613
                  %s2543 = sphi %s2416, %s2614
                $region77: #{tpu_custom_call.1} parent=73 // loop_header_branch
                  %2540 = sbr.rel (%p2537) target = $region81
                $region78: #{tpu_custom_call.1} parent=73 // loop_body
                  %v2544 = vld [vmem:[%s2542] sm:$0xff]
                  %2545 = vst [vmem:[%s2543] sm:$0xff] %v2544
                  %v2546 = vld [vmem:[%s2542 + $0x8] sm:$0xff]
                  %2547 = vst [vmem:[%s2543 + $0x8] sm:$0xff] %v2546
                  %v2548 = vld [vmem:[%s2542 + $0x10] sm:$0xff]
                  %2549 = vst [vmem:[%s2543 + $0x10] sm:$0xff] %v2548
                  %v2550 = vld [vmem:[%s2542 + $0x18] sm:$0xff]
                  %2551 = vst [vmem:[%s2543 + $0x18] sm:$0xff] %v2550
                  %v2552 = vld [vmem:[%s2542 + $0x20] sm:$0xff]
                  %2553 = vst [vmem:[%s2543 + $0x20] sm:$0xff] %v2552
                  %v2554 = vld [vmem:[%s2542 + $0x28] sm:$0xff]
                  %2555 = vst [vmem:[%s2543 + $0x28] sm:$0xff] %v2554
                  %v2556 = vld [vmem:[%s2542 + $0x30] sm:$0xff]
                  %2557 = vst [vmem:[%s2543 + $0x30] sm:$0xff] %v2556
                  %v2558 = vld [vmem:[%s2542 + $0x38] sm:$0xff]
                  %2559 = vst [vmem:[%s2543 + $0x38] sm:$0xff] %v2558
                  %v2560 = vld [vmem:[%s2542 + $0x40] sm:$0xff]
                  %2561 = vst [vmem:[%s2543 + $0x40] sm:$0xff] %v2560
                  %v2562 = vld [vmem:[%s2542 + $0x48] sm:$0xff]
                  %2563 = vst [vmem:[%s2543 + $0x48] sm:$0xff] %v2562
                  %v2564 = vld [vmem:[%s2542 + $0x50] sm:$0xff]
                  %2565 = vst [vmem:[%s2543 + $0x50] sm:$0xff] %v2564
                  %v2566 = vld [vmem:[%s2542 + $0x58] sm:$0xff]
                  %2567 = vst [vmem:[%s2543 + $0x58] sm:$0xff] %v2566
                  %v2568 = vld [vmem:[%s2542 + $0x60] sm:$0xff]
                  %2569 = vst [vmem:[%s2543 + $0x60] sm:$0xff] %v2568
                  %v2570 = vld [vmem:[%s2542 + $0x68] sm:$0xff]
                  %2571 = vst [vmem:[%s2543 + $0x68] sm:$0xff] %v2570
                  %v2572 = vld [vmem:[%s2542 + $0x70] sm:$0xff]
                  %2573 = vst [vmem:[%s2543 + $0x70] sm:$0xff] %v2572
                  %v2574 = vld [vmem:[%s2542 + $0x78] sm:$0xff]
                  %2575 = vst [vmem:[%s2543 + $0x78] sm:$0xff] %v2574
                  %v2576 = vld [vmem:[%s2542 + $0x80] sm:$0xff]
                  %2577 = vst [vmem:[%s2543 + $0x80] sm:$0xff] %v2576
                  %v2578 = vld [vmem:[%s2542 + $0x88] sm:$0xff]
                  %2579 = vst [vmem:[%s2543 + $0x88] sm:$0xff] %v2578
                  %v2580 = vld [vmem:[%s2542 + $0x90] sm:$0xff]
                  %2581 = vst [vmem:[%s2543 + $0x90] sm:$0xff] %v2580
                  %v2582 = vld [vmem:[%s2542 + $0x98] sm:$0xff]
                  %2583 = vst [vmem:[%s2543 + $0x98] sm:$0xff] %v2582
                  %v2584 = vld [vmem:[%s2542 + $0xa0] sm:$0xff]
                  %2585 = vst [vmem:[%s2543 + $0xa0] sm:$0xff] %v2584
                  %v2586 = vld [vmem:[%s2542 + $0xa8] sm:$0xff]
                  %2587 = vst [vmem:[%s2543 + $0xa8] sm:$0xff] %v2586
                  %v2588 = vld [vmem:[%s2542 + $0xb0] sm:$0xff]
                  %2589 = vst [vmem:[%s2543 + $0xb0] sm:$0xff] %v2588
                  %v2590 = vld [vmem:[%s2542 + $0xb8] sm:$0xff]
                  %2591 = vst [vmem:[%s2543 + $0xb8] sm:$0xff] %v2590
                  %v2592 = vld [vmem:[%s2542 + $0xc0] sm:$0xff]
                  %2593 = vst [vmem:[%s2543 + $0xc0] sm:$0xff] %v2592
                  %v2594 = vld [vmem:[%s2542 + $0xc8] sm:$0xff]
                  %2595 = vst [vmem:[%s2543 + $0xc8] sm:$0xff] %v2594
                  %v2596 = vld [vmem:[%s2542 + $0xd0] sm:$0xff]
                  %2597 = vst [vmem:[%s2543 + $0xd0] sm:$0xff] %v2596
                  %v2598 = vld [vmem:[%s2542 + $0xd8] sm:$0xff]
                  %2599 = vst [vmem:[%s2543 + $0xd8] sm:$0xff] %v2598
                  %v2600 = vld [vmem:[%s2542 + $0xe0] sm:$0xff]
                  %2601 = vst [vmem:[%s2543 + $0xe0] sm:$0xff] %v2600
                  %v2602 = vld [vmem:[%s2542 + $0xe8] sm:$0xff]
                  %2603 = vst [vmem:[%s2543 + $0xe8] sm:$0xff] %v2602
                  %v2604 = vld [vmem:[%s2542 + $0xf0] sm:$0xff]
                  %2605 = vst [vmem:[%s2543 + $0xf0] sm:$0xff] %v2604
                  %v2606 = vld [vmem:[%s2542 + $0xf8] sm:$0xff]
                  %2607 = vst [vmem:[%s2543 + $0xf8] sm:$0xff] %v2606
                  %s2608 = sadd.s32 1, %s2541
                  %p2609 = scmp.ge.s32.totalorder %s2608, %s2534
                  %s2610 = scalar_select %p2609, 0, %s2608
                  %s2611 = smul.u32 %s2610, 256
                  %s2612 = smul.u32 %s2610, 256
                  %s2613 = scalar_lea.vmem %s2405, %s2611 [#allocation2]
                  %s2614 = scalar_lea.vmem %s2416, %s2612
                $region79: #{tpu_custom_call.1} parent=73 // loop_footer
                  %s2538 = sadd.s32 %s2536, 1
                $region80: #{tpu_custom_call.1} parent=73 // loop_footer_branch
                  %2535 = sbr.rel target = $region76
                $region81: #{tpu_custom_call.1} parent=73 // loop_exit
                  _
                %s2615 = sshrl.u32 %s2412, 5
                %s2616 = sand.u32 %s2412, 31
                %s2617 = smul.u32 %s2615, 32
                %s2618 = smul.u32 8, %s2617
                %s2619 = scalar_lea.vmem %s2405, %s2618 [#allocation2]
                %s2620 = smul.u32 8, %s2617
                %s2621 = scalar_lea.vmem %s2416, %s2620
                // While loop
                $region82: #{tpu_custom_call.1} parent=73 // loop_pre_header
                  _
                $region83: #{tpu_custom_call.1} parent=73 // loop_header
                  %s2623 = sphi 0, %s2625
                  %p2624 = scmp.ge.s32.totalorder %s2623, %s2616
                  %s2628 = sphi 0, %s2635
                  %s2629 = sphi %s2619, %s2638
                  %s2630 = sphi %s2621, %s2639
                $region84: #{tpu_custom_call.1} parent=73 // loop_header_branch
                  %2627 = sbr.rel (%p2624) target = $region88
                $region85: #{tpu_custom_call.1} parent=73 // loop_body
                  %v2631 = vld [vmem:[%s2629] sm:$0xff]
                  %2632 = vst [vmem:[%s2630] sm:$0xff] %v2631
                  %s2633 = sadd.s32 1, %s2628
                  %p2634 = scmp.ge.s32.totalorder %s2633, %s2616
                  %s2635 = scalar_select %p2634, 0, %s2633
                  %s2636 = smul.u32 %s2635, 8
                  %s2637 = smul.u32 %s2635, 8
                  %s2638 = scalar_lea.vmem %s2619, %s2636 [#allocation2]
                  %s2639 = scalar_lea.vmem %s2621, %s2637
                $region86: #{tpu_custom_call.1} parent=73 // loop_footer
                  %s2625 = sadd.s32 %s2623, 1
                $region87: #{tpu_custom_call.1} parent=73 // loop_footer_branch
                  %2622 = sbr.rel target = $region83
                $region88: #{tpu_custom_call.1} parent=73 // loop_exit
                  _
              $region74: #{tpu_custom_call.1} parent=51 // pred_fallthru
                _
              // Predicated region
              $region89: #{tpu_custom_call.1} parent=51 // pred_check
                _
              $region90: #{tpu_custom_call.1} parent=51 // pred_check_branch
                %2641 = sbr.rel target = $region92
              $region91: #{tpu_custom_call.1} parent=51 // pred_region
                _
              $region92: #{tpu_custom_call.1} parent=51 // pred_fallthru
                _
            $region52: #{tpu_custom_call.1} parent=47 // pred_fallthru
              _
            // Predicated region
            $region53: #{tpu_custom_call.1} parent=47 // pred_check
              _
            $region54: #{tpu_custom_call.1} parent=47 // pred_check_branch
              %2423 = sbr.rel target = $region56
            $region55: #{tpu_custom_call.1} parent=47 // pred_region
              %s2425 = ssub.s32 256, 1
              %s2426 = sshrl.u32 %s2412, 5
              // While loop
              $region57: #{tpu_custom_call.1} parent=55 // loop_pre_header
                _
              $region58: #{tpu_custom_call.1} parent=55 // loop_header
                %s2428 = sphi 0, %s2430
                %p2429 = scmp.ge.s32.totalorder %s2428, %s2426
                %s2433 = sphi 0, %s2502
                %s2434 = sphi %s2405, %s2505
                %s2435 = sphi %s2416, %s2506
              $region59: #{tpu_custom_call.1} parent=55 // loop_header_branch
                %2432 = sbr.rel (%p2429) target = $region63
              $region60: #{tpu_custom_call.1} parent=55 // loop_body
                %v2436 = vld [vmem:[%s2434] sm:%s2425]
                %2437 = vst [vmem:[%s2435] sm:%s2425] %v2436
                %v2438 = vld [vmem:[%s2434 + $0x8] sm:%s2425]
                %2439 = vst [vmem:[%s2435 + $0x8] sm:%s2425] %v2438
                %v2440 = vld [vmem:[%s2434 + $0x10] sm:%s2425]
                %2441 = vst [vmem:[%s2435 + $0x10] sm:%s2425] %v2440
                %v2442 = vld [vmem:[%s2434 + $0x18] sm:%s2425]
                %2443 = vst [vmem:[%s2435 + $0x18] sm:%s2425] %v2442
                %v2444 = vld [vmem:[%s2434 + $0x20] sm:%s2425]
                %2445 = vst [vmem:[%s2435 + $0x20] sm:%s2425] %v2444
                %v2446 = vld [vmem:[%s2434 + $0x28] sm:%s2425]
                %2447 = vst [vmem:[%s2435 + $0x28] sm:%s2425] %v2446
                %v2448 = vld [vmem:[%s2434 + $0x30] sm:%s2425]
                %2449 = vst [vmem:[%s2435 + $0x30] sm:%s2425] %v2448
                %v2450 = vld [vmem:[%s2434 + $0x38] sm:%s2425]
                %2451 = vst [vmem:[%s2435 + $0x38] sm:%s2425] %v2450
                %v2452 = vld [vmem:[%s2434 + $0x40] sm:%s2425]
                %2453 = vst [vmem:[%s2435 + $0x40] sm:%s2425] %v2452
                %v2454 = vld [vmem:[%s2434 + $0x48] sm:%s2425]
                %2455 = vst [vmem:[%s2435 + $0x48] sm:%s2425] %v2454
                %v2456 = vld [vmem:[%s2434 + $0x50] sm:%s2425]
                %2457 = vst [vmem:[%s2435 + $0x50] sm:%s2425] %v2456
                %v2458 = vld [vmem:[%s2434 + $0x58] sm:%s2425]
                %2459 = vst [vmem:[%s2435 + $0x58] sm:%s2425] %v2458
                %v2460 = vld [vmem:[%s2434 + $0x60] sm:%s2425]
                %2461 = vst [vmem:[%s2435 + $0x60] sm:%s2425] %v2460
                %v2462 = vld [vmem:[%s2434 + $0x68] sm:%s2425]
                %2463 = vst [vmem:[%s2435 + $0x68] sm:%s2425] %v2462
                %v2464 = vld [vmem:[%s2434 + $0x70] sm:%s2425]
                %2465 = vst [vmem:[%s2435 + $0x70] sm:%s2425] %v2464
                %v2466 = vld [vmem:[%s2434 + $0x78] sm:%s2425]
                %2467 = vst [vmem:[%s2435 + $0x78] sm:%s2425] %v2466
                %v2468 = vld [vmem:[%s2434 + $0x80] sm:%s2425]
                %2469 = vst [vmem:[%s2435 + $0x80] sm:%s2425] %v2468
                %v2470 = vld [vmem:[%s2434 + $0x88] sm:%s2425]
                %2471 = vst [vmem:[%s2435 + $0x88] sm:%s2425] %v2470
                %v2472 = vld [vmem:[%s2434 + $0x90] sm:%s2425]
                %2473 = vst [vmem:[%s2435 + $0x90] sm:%s2425] %v2472
                %v2474 = vld [vmem:[%s2434 + $0x98] sm:%s2425]
                %2475 = vst [vmem:[%s2435 + $0x98] sm:%s2425] %v2474
                %v2476 = vld [vmem:[%s2434 + $0xa0] sm:%s2425]
                %2477 = vst [vmem:[%s2435 + $0xa0] sm:%s2425] %v2476
                %v2478 = vld [vmem:[%s2434 + $0xa8] sm:%s2425]
                %2479 = vst [vmem:[%s2435 + $0xa8] sm:%s2425] %v2478
                %v2480 = vld [vmem:[%s2434 + $0xb0] sm:%s2425]
                %2481 = vst [vmem:[%s2435 + $0xb0] sm:%s2425] %v2480
                %v2482 = vld [vmem:[%s2434 + $0xb8] sm:%s2425]
                %2483 = vst [vmem:[%s2435 + $0xb8] sm:%s2425] %v2482
                %v2484 = vld [vmem:[%s2434 + $0xc0] sm:%s2425]
                %2485 = vst [vmem:[%s2435 + $0xc0] sm:%s2425] %v2484
                %v2486 = vld [vmem:[%s2434 + $0xc8] sm:%s2425]
                %2487 = vst [vmem:[%s2435 + $0xc8] sm:%s2425] %v2486
                %v2488 = vld [vmem:[%s2434 + $0xd0] sm:%s2425]
                %2489 = vst [vmem:[%s2435 + $0xd0] sm:%s2425] %v2488
                %v2490 = vld [vmem:[%s2434 + $0xd8] sm:%s2425]
                %2491 = vst [vmem:[%s2435 + $0xd8] sm:%s2425] %v2490
                %v2492 = vld [vmem:[%s2434 + $0xe0] sm:%s2425]
                %2493 = vst [vmem:[%s2435 + $0xe0] sm:%s2425] %v2492
                %v2494 = vld [vmem:[%s2434 + $0xe8] sm:%s2425]
                %2495 = vst [vmem:[%s2435 + $0xe8] sm:%s2425] %v2494
                %v2496 = vld [vmem:[%s2434 + $0xf0] sm:%s2425]
                %2497 = vst [vmem:[%s2435 + $0xf0] sm:%s2425] %v2496
                %v2498 = vld [vmem:[%s2434 + $0xf8] sm:%s2425]
                %2499 = vst [vmem:[%s2435 + $0xf8] sm:%s2425] %v2498
                %s2500 = sadd.s32 1, %s2433
                %p2501 = scmp.ge.s32.totalorder %s2500, %s2426
                %s2502 = scalar_select %p2501, 0, %s2500
                %s2503 = smul.u32 %s2502, 256
                %s2504 = smul.u32 %s2502, 256
                %s2505 = scalar_lea.vmem %s2405, %s2503 [#allocation2]
                %s2506 = scalar_lea.vmem %s2416, %s2504
              $region61: #{tpu_custom_call.1} parent=55 // loop_footer
                %s2430 = sadd.s32 %s2428, 1
              $region62: #{tpu_custom_call.1} parent=55 // loop_footer_branch
                %2427 = sbr.rel target = $region58
              $region63: #{tpu_custom_call.1} parent=55 // loop_exit
                _
              %s2507 = sshrl.u32 %s2412, 5
              %s2508 = sand.u32 %s2412, 31
              %s2509 = smul.u32 %s2507, 32
              %s2510 = smul.u32 8, %s2509
              %s2511 = scalar_lea.vmem %s2405, %s2510 [#allocation2]
              %s2512 = smul.u32 8, %s2509
              %s2513 = scalar_lea.vmem %s2416, %s2512
              // While loop
              $region64: #{tpu_custom_call.1} parent=55 // loop_pre_header
                _
              $region65: #{tpu_custom_call.1} parent=55 // loop_header
                %s2515 = sphi 0, %s2517
                %p2516 = scmp.ge.s32.totalorder %s2515, %s2508
                %s2520 = sphi 0, %s2527
                %s2521 = sphi %s2511, %s2530
                %s2522 = sphi %s2513, %s2531
              $region66: #{tpu_custom_call.1} parent=55 // loop_header_branch
                %2519 = sbr.rel (%p2516) target = $region70
              $region67: #{tpu_custom_call.1} parent=55 // loop_body
                %v2523 = vld [vmem:[%s2521] sm:%s2425]
                %2524 = vst [vmem:[%s2522] sm:%s2425] %v2523
                %s2525 = sadd.s32 1, %s2520
                %p2526 = scmp.ge.s32.totalorder %s2525, %s2508
                %s2527 = scalar_select %p2526, 0, %s2525
                %s2528 = smul.u32 %s2527, 8
                %s2529 = smul.u32 %s2527, 8
                %s2530 = scalar_lea.vmem %s2511, %s2528 [#allocation2]
                %s2531 = scalar_lea.vmem %s2513, %s2529
              $region68: #{tpu_custom_call.1} parent=55 // loop_footer
                %s2517 = sadd.s32 %s2515, 1
              $region69: #{tpu_custom_call.1} parent=55 // loop_footer_branch
                %2514 = sbr.rel target = $region65
              $region70: #{tpu_custom_call.1} parent=55 // loop_exit
                _
            $region56: #{tpu_custom_call.1} parent=47 // pred_fallthru
              _
          $region48: #{tpu_custom_call.1} parent=43 // pred_fallthru
            _
          %2642 = vnop
        $region44: #{tpu_custom_call.1} parent=39 // pred_fallthru
          _
      $region40: #{tpu_custom_call.1} parent=5 // pred_fallthru
        _
      %p2643 = scmp.le.s32.totalorder 2, %s11
      // Predicated region
      $region93: #{tpu_custom_call.1} parent=5 // pred_check
        %p2644 = pneg %p2643
      $region94: #{tpu_custom_call.1} parent=5 // pred_check_branch
        %2646 = sbr.rel (%p2644) target = $region96
      $region95: #{tpu_custom_call.1} parent=5 // pred_region
        %s2647 = ssub.s32 %s11, 2
        // Predicated region
        $region97: #{tpu_custom_call.1} parent=95 // pred_check
          %p2648 = pneg %p150
        $region98: #{tpu_custom_call.1} parent=95 // pred_check_branch
          %2650 = sbr.rel (%p2648) target = $region100
        $region99: #{tpu_custom_call.1} parent=95 // pred_region
          %s2651 = sand.u32 %s135, 1
          %s2652 = sand.u32 %s135, 1
          %s2653 = smul.addr %s2652, 512
          %s2654 = scalar_lea.vmem [#allocation2], %s2653
        $region100: #{tpu_custom_call.1} parent=95 // pred_fallthru
          _
      $region96: #{tpu_custom_call.1} parent=5 // pred_fallthru
        _
    $region6: #{tpu_custom_call.1} parent=1 // loop_footer
      %s15 = sadd.s32 1, %s11
    $region7: #{tpu_custom_call.1} parent=1 // loop_footer_branch
      %10 = sbr.rel target = $region3
    $region8: #{tpu_custom_call.1} parent=1 // loop_exit
      _

</llo_original>
